<compile_context>
chip_gen: v7x
topology: tpu7x:2x2x1
jax: 0.10.0
libtpu: 0.0.40
codegen_flags: <defaults>
</compile_context>

<pallas_src>
import numpy as np

import jax
import jax.numpy as jnp
from jax.experimental import pallas as pl
from jax.experimental.pallas import tpu as pltpu


def _round_up(n, m):
    return ((n + m - 1) // m) * m


# -----------------------------------------------------------------------------
# Kernel: grid = (num_layers,) (sequential / "arbitrary").
# -----------------------------------------------------------------------------
def _encoder_kernel(x_ref, wih_ref, whh_ref, b_ref, h0_ref, c0_ref,   # inputs
                    out_ref, hT_ref, cT_ref,                          # outputs
                    act, xproj, h_scr, c_scr):                        # scratch
    l = pl.program_id(0)
    last = pl.num_programs(0) - 1
    Bp, Hp = h_scr.shape           # padded batch / hidden
    T = act.shape[0] // Bp         # number of time steps

    # ---- layer 0: initial state from (h0, c0); input projection from x -------
    @pl.when(l == 0)
    def _():
        h_scr[...] = h0_ref[...].astype(jnp.float32)
        c_scr[...] = c0_ref[...].astype(jnp.float32)
        # Hoisted input projection for ALL time steps: (T*Bp, Fp) @ (Fp, 4Hp).
        xproj[...] = (jnp.dot(x_ref[...], wih_ref[...],
                              preferred_element_type=jnp.float32)
                      + b_ref[...])

    # ---- layers > 0: input is the previous layer's output sequence (in VMEM);
    #      (h, c) carry over in scratch = chained encoder_hidden semantics -----
    @pl.when(l != 0)
    def _():
        xproj[...] = (jnp.dot(act[...], wih_ref[0:Hp, :],
                              preferred_element_type=jnp.float32)
                      + b_ref[...])

    # ---- sequential recurrence: only h_prev @ W_hh is on the critical path ---
    def step(t, carry):
        h_prev, c_prev = carry
        row = pl.multiple_of(t * Bp, Bp)
        gates = xproj[pl.ds(row, Bp), :] + jnp.dot(
            h_prev, whh_ref[...], preferred_element_type=jnp.float32)
        # gate order [i, f, g, o]; Hp is a multiple of 128 -> lane-aligned slices
        i_g = jax.nn.sigmoid(gates[:, 0 * Hp:1 * Hp])
        f_g = jax.nn.sigmoid(gates[:, 1 * Hp:2 * Hp])
        g_g = jnp.tanh(gates[:, 2 * Hp:3 * Hp])
        o_g = jax.nn.sigmoid(gates[:, 3 * Hp:4 * Hp])
        c_new = f_g * c_prev + i_g * g_g
        h_new = o_g * jnp.tanh(c_new)
        act[pl.ds(row, Bp), :] = h_new     # feeds the next layer (stays on-chip)
        return h_new, c_new

    h_fin, c_fin = jax.lax.fori_loop(0, T, step, (h_scr[...], c_scr[...]))

    # carry the final state to the next layer (scratch persists across the grid)
    h_scr[...] = h_fin
    c_scr[...] = c_fin

    # only the last layer produces the module's outputs (single lane-dense store)
    @pl.when(l == last)
    def _():
        out_ref[...] = act[...].astype(out_ref.dtype)
        hT_ref[...] = h_fin.astype(hT_ref.dtype)
        cT_ref[...] = c_fin.astype(cT_ref.dtype)


# -----------------------------------------------------------------------------
# Parameter init: PyTorch nn.LSTM layout, pre-transposed, per-gate zero-padded
# to lane width 128, and stacked over layers for streaming via index_map.
# Use dtype=jnp.bfloat16 on v6e/v7x to halve weight footprint / double MXU rate
# (the kernel accumulates in fp32 either way).
# -----------------------------------------------------------------------------
def init_lstm_encoder_params(key, input_size, hidden_size, num_layers,
                             dtype=jnp.float32):
    H = hidden_size
    Hp = _round_up(H, 128)
    Fp = max(_round_up(input_size, 128), Hp)   # uniform padded input width
    k = 1.0 / (hidden_size ** 0.5)

    def pad_gate_cols(w):                      # (rows, 4H) -> (rows, 4Hp)
        r = w.shape[0]
        w = w.reshape(r, 4, H)
        w = jnp.pad(w, ((0, 0), (0, 0), (0, Hp - H)))
        return w.reshape(r, 4 * Hp)

    wih_l, whh_l, b_l, raw = [], [], [], []
    for layer in range(num_layers):
        in_sz = input_size if layer == 0 else H
        key, k1, k2, k3, k4 = jax.random.split(key, 5)
        w_ih = jax.random.uniform(k1, (4 * H, in_sz), dtype, -k, k)
        w_hh = jax.random.uniform(k2, (4 * H, H), dtype, -k, k)
        b_ih = jax.random.uniform(k3, (4 * H,), dtype, -k, k)
        b_hh = jax.random.uniform(k4, (4 * H,), dtype, -k, k)
        raw.append(dict(w_ih=w_ih, w_hh=w_hh, b=b_ih + b_hh))

        wih_t = pad_gate_cols(w_ih.T)                              # (in_sz, 4Hp)
        wih_t = jnp.pad(wih_t, ((0, Fp - in_sz), (0, 0)))          # (Fp, 4Hp)
        whh_t = pad_gate_cols(w_hh.T)                              # (H, 4Hp)
        whh_t = jnp.pad(whh_t, ((0, Hp - H), (0, 0)))              # (Hp, 4Hp)
        bias = pad_gate_cols((b_ih + b_hh).reshape(1, 4 * H))      # (1, 4Hp)

        wih_l.append(wih_t); whh_l.append(whh_t); b_l.append(bias)

    params = {
        "w_ih": jnp.stack(wih_l),    # (L, Fp, 4Hp)
        "w_hh": jnp.stack(whh_l),    # (L, Hp, 4Hp)
        "bias": jnp.stack(b_l),      # (L, 1, 4Hp)
    }
    return params, raw


# -----------------------------------------------------------------------------
# Forward wrapper: mirrors LSTM_Encoder.forward (batch_first=True).
# -----------------------------------------------------------------------------
@jax.jit
def lstm_encoder_forward(params, x_input, encoder_hidden):
    """x_input: (B, T, input_size); encoder_hidden: ((1,B,H), (1,B,H)).
    Returns lstm_out (B, T, H), (h (1,B,H), c (1,B,H))."""
    w_ih, w_hh, bias = params["w_ih"], params["w_hh"], params["bias"]
    h0, c0 = encoder_hidden
    if h0.ndim == 3:
        h0 = h0[0]
    if c0.ndim == 3:
        c0 = c0[0]

    B, T, I = x_input.shape
    H = h0.shape[-1]
    L, Fp, H4p = w_ih.shape
    Hp = H4p // 4
    Bp = _round_up(B, 8)
    dtype = x_input.dtype

    # time-major, pad batch->Bp and features->Fp, flatten to 2D (lane-dense)
    x_tm = jnp.transpose(x_input, (1, 0, 2))                       # (T, B, I)
    x_tm = jnp.pad(x_tm, ((0, 0), (0, Bp - B), (0, Fp - I)))
    x2d = x_tm.reshape(T * Bp, Fp)

    h0p = jnp.pad(h0, ((0, Bp - B), (0, Hp - H))).astype(dtype)
    c0p = jnp.pad(c0, ((0, Bp - B), (0, Hp - H))).astype(dtype)

    out_shapes = (
        jax.ShapeDtypeStruct((T * Bp, Hp), dtype),   # all hidden states (2D)
        jax.ShapeDtypeStruct((Bp, Hp), dtype),       # final h (last layer)
        jax.ShapeDtypeStruct((Bp, Hp), dtype),       # final c (last layer)
    )

    grid_spec = pltpu.PrefetchScalarGridSpec(
        num_scalar_prefetch=0,
        grid=(L,),
        in_specs=[
            pl.BlockSpec((T * Bp, Fp), lambda l: (0, 0)),            # x (resident)
            pl.BlockSpec((None, Fp, 4 * Hp), lambda l: (l, 0, 0)),   # W_ih[l]
            pl.BlockSpec((None, Hp, 4 * Hp), lambda l: (l, 0, 0)),   # W_hh[l]
            pl.BlockSpec((None, 1, 4 * Hp), lambda l: (l, 0, 0)),    # bias[l]
            pl.BlockSpec((Bp, Hp), lambda l: (0, 0)),                # h0
            pl.BlockSpec((Bp, Hp), lambda l: (0, 0)),                # c0
        ],
        out_specs=[
            pl.BlockSpec((T * Bp, Hp), lambda l: (0, 0)),            # out (resident)
            pl.BlockSpec((Bp, Hp), lambda l: (0, 0)),                # hT (resident)
            pl.BlockSpec((Bp, Hp), lambda l: (0, 0)),                # cT (resident)
        ],
        scratch_shapes=[
            pltpu.VMEM((T * Bp, Hp), jnp.float32),      # inter-layer activations
            pltpu.VMEM((T * Bp, 4 * Hp), jnp.float32),  # hoisted input projection
            pltpu.VMEM((Bp, Hp), jnp.float32),          # h carry (fp32)
            pltpu.VMEM((Bp, Hp), jnp.float32),          # c carry (fp32)
        ],
    )

    out2d, hT, cT = pl.pallas_call(
        _encoder_kernel,
        out_shape=out_shapes,
        grid_spec=grid_spec,
        compiler_params=pltpu.CompilerParams(
            dimension_semantics=("arbitrary",)),        # layers are sequential
    )(x2d, w_ih, w_hh, bias, h0p, c0p)

    lstm_out = out2d.reshape(T, Bp, Hp)[:, :B, :H].transpose(1, 0, 2)  # (B,T,H)
    hidden = (hT[:B, :H][None], cT[:B, :H][None])                      # (1,B,H)
    return lstm_out, hidden


# -----------------------------------------------------------------------------
# Pure-JAX reference (mirrors PyTorch chaining) for correctness checking.
# -----------------------------------------------------------------------------
def _reference_forward(raw_params, x, h0, c0):
    hi = jax.lax.Precision.HIGHEST
    h, c = h0[0], c0[0]
    inp = x
    for p in raw_params:
        w_ih, w_hh, b = p["w_ih"], p["w_hh"], p["b"]

        def step(carry, x_t, w_ih=w_ih, w_hh=w_hh, b=b):
            h, c = carry
            g = (jnp.dot(x_t, w_ih.T, precision=hi)
                 + jnp.dot(h, w_hh.T, precision=hi) + b)
            i, f, gg, o = jnp.split(g, 4, axis=-1)
            c = jax.nn.sigmoid(f) * c + jax.nn.sigmoid(i) * jnp.tanh(gg)
            h = jax.nn.sigmoid(o) * jnp.tanh(c)
            return (h, c), h

        (h, c), out = jax.lax.scan(step, (h, c), jnp.swapaxes(inp, 0, 1))
        inp = jnp.swapaxes(out, 0, 1)
    return inp, (h[None], c[None])


if __name__ == "__main__":
    input_size, hidden_size, num_layers = 4, 32, 2
    batch, seq_len = 2, 8

    key = jax.random.PRNGKey(0)
    key, kx = jax.random.split(key)
    params, raw_params = init_lstm_encoder_params(
        key, input_size, hidden_size, num_layers)

    x = jax.random.normal(kx, (batch, seq_len, input_size), dtype=jnp.float32)
    h0 = jnp.zeros((1, batch, hidden_size), jnp.float32)
    c0 = jnp.zeros((1, batch, hidden_size), jnp.float32)

    lstm_out, (h_n, c_n) = lstm_encoder_forward(params, x, (h0, c0))
    jax.block_until_ready((lstm_out, h_n, c_n))

    assert lstm_out.shape == (batch, seq_len, hidden_size)
    assert h_n.shape == (1, batch, hidden_size)
    assert c_n.shape == (1, batch, hidden_size)

    # correctness check against the pure-JAX reference
    ref_out, (ref_h, ref_c) = _reference_forward(raw_params, x, h0, c0)
    np.testing.assert_allclose(np.asarray(lstm_out), np.asarray(ref_out),
                               rtol=2e-2, atol=2e-2)
    np.testing.assert_allclose(np.asarray(h_n), np.asarray(ref_h),
                               rtol=2e-2, atol=2e-2)
    np.testing.assert_allclose(np.asarray(c_n), np.asarray(ref_c),
                               rtol=2e-2, atol=2e-2)

    print("KERNEL_OK")
</pallas_src>

<mosaic_0001>
module attributes {stable_mosaic.version = 11 : i64} {
  func.func @_encoder_kernel(%arg0: i32, %arg1: memref<64x128xf32, #tpu.memory_space<vmem>>, %arg2: memref<1x128x512xf32, #tpu.memory_space<vmem>>, %arg3: memref<1x128x512xf32, #tpu.memory_space<vmem>>, %arg4: memref<1x1x512xf32, #tpu.memory_space<vmem>>, %arg5: memref<8x128xf32, #tpu.memory_space<vmem>>, %arg6: memref<8x128xf32, #tpu.memory_space<vmem>>, %arg7: memref<64x128xf32, #tpu.memory_space<vmem>>, %arg8: memref<8x128xf32, #tpu.memory_space<vmem>>, %arg9: memref<8x128xf32, #tpu.memory_space<vmem>>, %arg10: memref<64x128xf32, #tpu.memory_space<vmem>>, %arg11: memref<64x512xf32, #tpu.memory_space<vmem>>, %arg12: memref<8x128xf32, #tpu.memory_space<vmem>>, %arg13: memref<8x128xf32, #tpu.memory_space<vmem>>) attributes {dimension_semantics = [#tpu.dimension_semantics<arbitrary>], iteration_bounds = array<i64: 2>, scalar_prefetch = 0 : i64, scratch_operands = 4 : i64, tpu.core_type = #tpu.core_type<tc>, window_params = [{pipeline_mode = #tpu.pipeline_mode<synchronous>, transform_indices = @transform_0, window_bounds = array<i64: 64, 128>}, {transform_indices = @transform_1, window_bounds = array<i64: 1, 128, 512>}, {transform_indices = @transform_2, window_bounds = array<i64: 1, 128, 512>}, {transform_indices = @transform_3, window_bounds = array<i64: 1, 1, 512>}, {pipeline_mode = #tpu.pipeline_mode<synchronous>, transform_indices = @transform_4, window_bounds = array<i64: 8, 128>}, {pipeline_mode = #tpu.pipeline_mode<synchronous>, transform_indices = @transform_5, window_bounds = array<i64: 8, 128>}, {pipeline_mode = #tpu.pipeline_mode<synchronous>, transform_indices = @transform_6, window_bounds = array<i64: 64, 128>}, {pipeline_mode = #tpu.pipeline_mode<synchronous>, transform_indices = @transform_7, window_bounds = array<i64: 8, 128>}, {pipeline_mode = #tpu.pipeline_mode<synchronous>, transform_indices = @transform_8, window_bounds = array<i64: 8, 128>}]} {
    %c0_i32 = arith.constant 0 : i32
    %0 = arith.cmpi eq, %arg0, %c0_i32 : i32
    %1 = arith.extui %0 : i1 to i32
    %c0_i32_0 = arith.constant 0 : i32
    %2 = arith.cmpi ne, %1, %c0_i32_0 : i32
    scf.if %2 {
      %c0_14 = arith.constant 0 : index
      %c0_15 = arith.constant 0 : index
      %15 = vector.load %arg5[%c0_14, %c0_15] : memref<8x128xf32, #tpu.memory_space<vmem>>, vector<8x128xf32>
      %c0_16 = arith.constant 0 : index
      %c0_17 = arith.constant 0 : index
      %16 = vector.load %arg12[%c0_16, %c0_17] : memref<8x128xf32, #tpu.memory_space<vmem>>, vector<8x128xf32>
      tpu.vector_store %arg12[%c0_16, %c0_17], %15 {strides = array<i32>} : memref<8x128xf32, #tpu.memory_space<vmem>>, vector<8x128xf32>,
      %c0_18 = arith.constant 0 : index
      %c0_19 = arith.constant 0 : index
      %17 = vector.load %arg6[%c0_18, %c0_19] : memref<8x128xf32, #tpu.memory_space<vmem>>, vector<8x128xf32>
      %c0_20 = arith.constant 0 : index
      %c0_21 = arith.constant 0 : index
      %18 = vector.load %arg13[%c0_20, %c0_21] : memref<8x128xf32, #tpu.memory_space<vmem>>, vector<8x128xf32>
      tpu.vector_store %arg13[%c0_20, %c0_21], %17 {strides = array<i32>} : memref<8x128xf32, #tpu.memory_space<vmem>>, vector<8x128xf32>,
      %c0_22 = arith.constant 0 : index
      %c0_23 = arith.constant 0 : index
      %19 = vector.load %arg1[%c0_22, %c0_23] : memref<64x128xf32, #tpu.memory_space<vmem>>, vector<64x128xf32>
      %c0_24 = arith.constant 0 : index
      %c0_25 = arith.constant 0 : index
      %c0_26 = arith.constant 0 : index
      %20 = vector.load %arg2[%c0_24, %c0_25, %c0_26] : memref<1x128x512xf32, #tpu.memory_space<vmem>>, vector<1x128x512xf32>
      %21 = vector.shape_cast %20 : vector<1x128x512xf32> to vector<128x512xf32>
      %cst = arith.constant dense<0.000000e+00> : vector<64x512xf32>
      %22 = tpu.matmul %19, %21, %cst {dimension_numbers = #tpu.dot_dimension_numbers<[1], [0], [0], [1], [0, 0, 1, 1], [], []>} : vector<64x128xf32>, vector<128x512xf32>, vector<64x512xf32> -> vector<64x512xf32>
      %c0_27 = arith.constant 0 : index
      %c0_28 = arith.constant 0 : index
      %c0_29 = arith.constant 0 : index
      %23 = vector.load %arg4[%c0_27, %c0_28, %c0_29] : memref<1x1x512xf32, #tpu.memory_space<vmem>>, vector<1x1x512xf32>
      %24 = vector.shape_cast %23 : vector<1x1x512xf32> to vector<1x512xf32>
      %25 = vector.broadcast %24 : vector<1x512xf32> to vector<64x512xf32>
      %26 = arith.addf %22, %25 : vector<64x512xf32>
      %c0_30 = arith.constant 0 : index
      %c0_31 = arith.constant 0 : index
      %27 = vector.load %arg11[%c0_30, %c0_31] : memref<64x512xf32, #tpu.memory_space<vmem>>, vector<64x512xf32>
      tpu.vector_store %arg11[%c0_30, %c0_31], %26 {strides = array<i32>} : memref<64x512xf32, #tpu.memory_space<vmem>>, vector<64x512xf32>,
    } else {
    }
    %c0_i32_1 = arith.constant 0 : i32
    %3 = arith.cmpi ne, %arg0, %c0_i32_1 : i32
    %4 = arith.extui %3 : i1 to i32
    %c0_i32_2 = arith.constant 0 : i32
    %5 = arith.cmpi ne, %4, %c0_i32_2 : i32
    scf.if %5 {
      %c0_14 = arith.constant 0 : index
      %c0_15 = arith.constant 0 : index
      %15 = vector.load %arg10[%c0_14, %c0_15] : memref<64x128xf32, #tpu.memory_space<vmem>>, vector<64x128xf32>
      %c0_16 = arith.constant 0 : index
      %c0_17 = arith.constant 0 : index
      %c0_18 = arith.constant 0 : index
      %16 = vector.load %arg2[%c0_16, %c0_17, %c0_18] : memref<1x128x512xf32, #tpu.memory_space<vmem>>, vector<1x128x512xf32>
      %17 = vector.shape_cast %16 : vector<1x128x512xf32> to vector<128x512xf32>
      %cst = arith.constant dense<0.000000e+00> : vector<64x512xf32>
      %18 = tpu.matmul %15, %17, %cst {dimension_numbers = #tpu.dot_dimension_numbers<[1], [0], [0], [1], [0, 0, 1, 1], [], []>} : vector<64x128xf32>, vector<128x512xf32>, vector<64x512xf32> -> vector<64x512xf32>
      %c0_19 = arith.constant 0 : index
      %c0_20 = arith.constant 0 : index
      %c0_21 = arith.constant 0 : index
      %19 = vector.load %arg4[%c0_19, %c0_20, %c0_21] : memref<1x1x512xf32, #tpu.memory_space<vmem>>, vector<1x1x512xf32>
      %20 = vector.shape_cast %19 : vector<1x1x512xf32> to vector<1x512xf32>
      %21 = vector.broadcast %20 : vector<1x512xf32> to vector<64x512xf32>
      %22 = arith.addf %18, %21 : vector<64x512xf32>
      %c0_22 = arith.constant 0 : index
      %c0_23 = arith.constant 0 : index
      %23 = vector.load %arg11[%c0_22, %c0_23] : memref<64x512xf32, #tpu.memory_space<vmem>>, vector<64x512xf32>
      tpu.vector_store %arg11[%c0_22, %c0_23], %22 {strides = array<i32>} : memref<64x512xf32, #tpu.memory_space<vmem>>, vector<64x512xf32>,
    } else {
    }
    %c0 = arith.constant 0 : index
    %c0_3 = arith.constant 0 : index
    %6 = vector.load %arg12[%c0, %c0_3] : memref<8x128xf32, #tpu.memory_space<vmem>>, vector<8x128xf32>
    %c0_4 = arith.constant 0 : index
    %c0_5 = arith.constant 0 : index
    %7 = vector.load %arg13[%c0_4, %c0_5] : memref<8x128xf32, #tpu.memory_space<vmem>>, vector<8x128xf32>
    %c0_i32_6 = arith.constant 0 : i32
    %c8_i32 = arith.constant 8 : i32
    %8 = arith.addi %c0_i32_6, %c8_i32 : i32
    %c1_i32 = arith.constant 1 : i32
    %9:2 = scf.for %arg14 = %c0_i32_6 to %8 step %c1_i32 iter_args(%arg15 = %6, %arg16 = %7) -> (vector<8x128xf32>, vector<8x128xf32>)  : i32 {
      %c8_i32_14 = arith.constant 8 : i32
      %15 = arith.muli %arg14, %c8_i32_14 : i32
      %16 = tpu.assume_multiple %15, 8 : i32
      %17 = arith.index_cast %16 : i32 to index
      %c0_15 = arith.constant 0 : index
      %18 = vector.load %arg11[%17, %c0_15] : memref<64x512xf32, #tpu.memory_space<vmem>>, vector<8x512xf32>
      %c0_16 = arith.constant 0 : index
      %c0_17 = arith.constant 0 : index
      %c0_18 = arith.constant 0 : index
      %19 = vector.load %arg3[%c0_16, %c0_17, %c0_18] : memref<1x128x512xf32, #tpu.memory_space<vmem>>, vector<1x128x512xf32>
      %20 = vector.shape_cast %19 : vector<1x128x512xf32> to vector<128x512xf32>
      %cst = arith.constant dense<0.000000e+00> : vector<8x512xf32>
      %21 = tpu.matmul %arg15, %20, %cst {dimension_numbers = #tpu.dot_dimension_numbers<[1], [0], [0], [1], [0, 0, 1, 1], [], []>} : vector<8x128xf32>, vector<128x512xf32>, vector<8x512xf32> -> vector<8x512xf32>
      %22 = arith.addf %18, %21 : vector<8x512xf32>
      %23 = vector.extract_strided_slice %22 {offsets = [0, 0], sizes = [8, 128], strides = [1, 1]} : vector<8x512xf32> to vector<8x128xf32>
      %24 = arith.negf %23 : vector<8x128xf32>
      %25 = math.exp %24 : vector<8x128xf32>
      %cst_19 = arith.constant 1.000000e+00 : f32
      %26 = vector.broadcast %cst_19 : f32 to vector<8x128xf32>
      %27 = arith.addf %26, %25 : vector<8x128xf32>
      %28 = arith.divf %26, %27 : vector<8x128xf32>
      %29 = vector.extract_strided_slice %22 {offsets = [0, 128], sizes = [8, 128], strides = [1, 1]} : vector<8x512xf32> to vector<8x128xf32>
      %30 = arith.negf %29 : vector<8x128xf32>
      %31 = math.exp %30 : vector<8x128xf32>
      %cst_20 = arith.constant 1.000000e+00 : f32
      %32 = vector.broadcast %cst_20 : f32 to vector<8x128xf32>
      %33 = arith.addf %32, %31 : vector<8x128xf32>
      %34 = arith.divf %32, %33 : vector<8x128xf32>
      %35 = vector.extract_strided_slice %22 {offsets = [0, 256], sizes = [8, 128], strides = [1, 1]} : vector<8x512xf32> to vector<8x128xf32>
      %36 = math.tanh %35 : vector<8x128xf32>
      %37 = vector.extract_strided_slice %22 {offsets = [0, 384], sizes = [8, 128], strides = [1, 1]} : vector<8x512xf32> to vector<8x128xf32>
      %38 = arith.negf %37 : vector<8x128xf32>
      %39 = math.exp %38 : vector<8x128xf32>
      %cst_21 = arith.constant 1.000000e+00 : f32
      %40 = vector.broadcast %cst_21 : f32 to vector<8x128xf32>
      %41 = arith.addf %40, %39 : vector<8x128xf32>
      %42 = arith.divf %40, %41 : vector<8x128xf32>
      %43 = arith.mulf %34, %arg16 : vector<8x128xf32>
      %44 = arith.mulf %28, %36 : vector<8x128xf32>
      %45 = arith.addf %43, %44 : vector<8x128xf32>
      %46 = math.tanh %45 : vector<8x128xf32>
      %47 = arith.mulf %42, %46 : vector<8x128xf32>
      %48 = arith.index_cast %16 : i32 to index
      %c0_22 = arith.constant 0 : index
      %49 = vector.load %arg10[%48, %c0_22] : memref<64x128xf32, #tpu.memory_space<vmem>>, vector<8x128xf32>
      tpu.vector_store %arg10[%48, %c0_22], %47 {strides = array<i32>} : memref<64x128xf32, #tpu.memory_space<vmem>>, vector<8x128xf32>,
      scf.yield %47, %45 : vector<8x128xf32>, vector<8x128xf32>
    }
    %c8_i32_7 = arith.constant 8 : i32
    %c0_8 = arith.constant 0 : index
    %c0_9 = arith.constant 0 : index
    %10 = vector.load %arg12[%c0_8, %c0_9] : memref<8x128xf32, #tpu.memory_space<vmem>>, vector<8x128xf32>
    tpu.vector_store %arg12[%c0_8, %c0_9], %9#0 {strides = array<i32>} : memref<8x128xf32, #tpu.memory_space<vmem>>, vector<8x128xf32>,
    %c0_10 = arith.constant 0 : index
    %c0_11 = arith.constant 0 : index
    %11 = vector.load %arg13[%c0_10, %c0_11] : memref<8x128xf32, #tpu.memory_space<vmem>>, vector<8x128xf32>
    tpu.vector_store %arg13[%c0_10, %c0_11], %9#1 {strides = array<i32>} : memref<8x128xf32, #tpu.memory_space<vmem>>, vector<8x128xf32>,
    %c1_i32_12 = arith.constant 1 : i32
    %12 = arith.cmpi eq, %arg0, %c1_i32_12 : i32
    %13 = arith.extui %12 : i1 to i32
    %c0_i32_13 = arith.constant 0 : i32
    %14 = arith.cmpi ne, %13, %c0_i32_13 : i32
    scf.if %14 {
      %c0_14 = arith.constant 0 : index
      %c0_15 = arith.constant 0 : index
      %15 = vector.load %arg10[%c0_14, %c0_15] : memref<64x128xf32, #tpu.memory_space<vmem>>, vector<64x128xf32>
      %c0_16 = arith.constant 0 : index
      %c0_17 = arith.constant 0 : index
      %16 = vector.load %arg7[%c0_16, %c0_17] : memref<64x128xf32, #tpu.memory_space<vmem>>, vector<64x128xf32>
      tpu.vector_store %arg7[%c0_16, %c0_17], %15 {strides = array<i32>} : memref<64x128xf32, #tpu.memory_space<vmem>>, vector<64x128xf32>,
      %c0_18 = arith.constant 0 : index
      %c0_19 = arith.constant 0 : index
      %17 = vector.load %arg8[%c0_18, %c0_19] : memref<8x128xf32, #tpu.memory_space<vmem>>, vector<8x128xf32>
      tpu.vector_store %arg8[%c0_18, %c0_19], %9#0 {strides = array<i32>} : memref<8x128xf32, #tpu.memory_space<vmem>>, vector<8x128xf32>,
      %c0_20 = arith.constant 0 : index
      %c0_21 = arith.constant 0 : index
      %18 = vector.load %arg9[%c0_20, %c0_21] : memref<8x128xf32, #tpu.memory_space<vmem>>, vector<8x128xf32>
      tpu.vector_store %arg9[%c0_20, %c0_21], %9#1 {strides = array<i32>} : memref<8x128xf32, #tpu.memory_space<vmem>>, vector<8x128xf32>,
    } else {
    }
    return
  }
  func.func @transform_0(%arg0: i32) -> (i32, i32) {
    %c0_i32 = arith.constant 0 : i32
    %c0_i32_0 = arith.constant 0 : i32
    %c0_i32_1 = arith.constant 0 : i32
    return %c0_i32, %c0_i32_0 : i32, i32
  }
  func.func @transform_1(%arg0: i32) -> (i32, i32, i32) {
    %c0_i32 = arith.constant 0 : i32
    %c0_i32_0 = arith.constant 0 : i32
    %c0_i32_1 = arith.constant 0 : i32
    return %arg0, %c0_i32, %c0_i32_0 : i32, i32, i32
  }
  func.func @transform_2(%arg0: i32) -> (i32, i32, i32) {
    %c0_i32 = arith.constant 0 : i32
    %c0_i32_0 = arith.constant 0 : i32
    %c0_i32_1 = arith.constant 0 : i32
    return %arg0, %c0_i32, %c0_i32_0 : i32, i32, i32
  }
  func.func @transform_3(%arg0: i32) -> (i32, i32, i32) {
    %c0_i32 = arith.constant 0 : i32
    %c0_i32_0 = arith.constant 0 : i32
    %c0_i32_1 = arith.constant 0 : i32
    return %arg0, %c0_i32, %c0_i32_0 : i32, i32, i32
  }
  func.func @transform_4(%arg0: i32) -> (i32, i32) {
    %c0_i32 = arith.constant 0 : i32
    %c0_i32_0 = arith.constant 0 : i32
    %c0_i32_1 = arith.constant 0 : i32
    return %c0_i32, %c0_i32_0 : i32, i32
  }
  func.func @transform_5(%arg0: i32) -> (i32, i32) {
    %c0_i32 = arith.constant 0 : i32
    %c0_i32_0 = arith.constant 0 : i32
    %c0_i32_1 = arith.constant 0 : i32
    return %c0_i32, %c0_i32_0 : i32, i32
  }
  func.func @transform_6(%arg0: i32) -> (i32, i32) {
    %c0_i32 = arith.constant 0 : i32
    %c0_i32_0 = arith.constant 0 : i32
    %c0_i32_1 = arith.constant 0 : i32
    return %c0_i32, %c0_i32_0 : i32, i32
  }
  func.func @transform_7(%arg0: i32) -> (i32, i32) {
    %c0_i32 = arith.constant 0 : i32
    %c0_i32_0 = arith.constant 0 : i32
    %c0_i32_1 = arith.constant 0 : i32
    return %c0_i32, %c0_i32_0 : i32, i32
  }
  func.func @transform_8(%arg0: i32) -> (i32, i32) {
    %c0_i32 = arith.constant 0 : i32
    %c0_i32_0 = arith.constant 0 : i32
    %c0_i32_1 = arith.constant 0 : i32
    return %c0_i32, %c0_i32_0 : i32, i32
  }
}

</mosaic_0001>

<llo_original>
// kernel: lstm_encoder_forward.1
$region0: #{lstm_encoder_forward.1}
  #allocation0 [shape = 'u32[]', space=smem, size = 0x4, offset = 0x4, fixed_abs, tag = 'smem constant byte address 0x4 - core index']
  #allocation1 [shape = 'u32[144,128]{1,0:T(1,128)}', space=vmem, size = 0x12000, scoped, tag = 'internal scratch']
  #allocation2 [shape = 'f32[64,128]{1,0:T(8,128)}', space=vmem, size = 0x8000, scoped, tag = 'scratch operand']
  #allocation3 [shape = 'f32[64,512]{1,0:T(8,128)}', space=vmem, size = 0x20000, scoped, tag = 'scratch operand']
  #allocation4 [shape = 'f32[8,128]{1,0:T(8,128)}', space=vmem, size = 0x1000, scoped, tag = 'scratch operand']
  #allocation5 [shape = 'f32[8,128]{1,0:T(8,128)}', space=vmem, size = 0x1000, scoped, tag = 'scratch operand']
  %s0 = inlined_call_operand.vmem [shape: f32[64,128], index: 0, kind: input, shape index: {}]
  %s1 = inlined_call_operand.hbm [shape: f32[2,128,512], index: 1, kind: input, shape index: {}]
  %s2 = inlined_call_operand.hbm [shape: f32[2,128,512], index: 2, kind: input, shape index: {}]
  %s3 = inlined_call_operand.vmem [shape: f32[2,1,512], index: 3, kind: input, shape index: {}]
  %s4 = inlined_call_operand.vmem [shape: f32[8,128], index: 4, kind: input, shape index: {}]
  %s5 = inlined_call_operand.vmem [shape: f32[8,128], index: 5, kind: input, shape index: {}]
  %s6 = inlined_call_operand.vmem [shape: f32[64,128], index: 6, kind: output, shape index: {0}]
  %s7 = inlined_call_operand.vmem [shape: f32[8,128], index: 7, kind: output, shape index: {1}]
  %s8 = inlined_call_operand.vmem [shape: f32[8,128], index: 8, kind: output, shape index: {2}]
  %9 = xla_tuple %s6, %s7, %s8
  %s10 = sld [smem:[#allocation0]]
  $region100: #{lstm_encoder_forward.1} parent=0
    _
  %s12 = ssub.s32 1, %s10
  %s13 = scalar_select 0, %s12, %s10
  $region1: #{lstm_encoder_forward.1} parent=0
    #allocation6 [shape = 'u8[524288]{0}', space=vmem, size = 0x80000, scoped, tag = 'input window, operand 1']
    #allocation7 [shape = 's32[2]{0}', space=sflag, size = 0x8, scoped, tag = 'scoped memory for lstm_encoder_forward.1']
    #allocation8 [shape = 'u8[524288]{0}', space=vmem, size = 0x80000, scoped, tag = 'input window, operand 2']
    #allocation9 [shape = 's32[2]{0}', space=sflag, size = 0x8, scoped, tag = 'scoped memory for lstm_encoder_forward.1']
    %14 = vsyncpa [#allocation7], 0
    %s15 = scalar_lea.sflag [#allocation7], 1
    %16 = vsyncpa %s15, 0
    %17 = vsyncpa [#allocation9], 0
    %s18 = scalar_lea.sflag [#allocation9], 1
    %19 = vsyncpa %s18, 0
    loop: start=0, step=1, limit=4
    $region2: #{lstm_encoder_forward.1} parent=1 // loop_pre_header
      _
    $region3: #{lstm_encoder_forward.1} parent=1 // loop_header
      %s21 = sphi 0, %s25
      %p22 = scmp.ge.s32.totalorder %s21, 4
      %s29 = sphi 0, %s29
      %s31 = sphi 0, %s29
      %s32 = sphi 0, %s31
      %s46 = sphi 0, %s32
      %s52 = sphi 0, %s54
      %s55 = sphi 0, %s52
      %s56 = sphi 0, %s55
      %s72 = sphi 0, %s56
      %s78 = sphi 0, %s80
      %s81 = sphi 0, %s78
      %s82 = sphi 0, %s81
      %s98 = sphi 0, %s82
      %s104 = sphi 0, %s106
      %s107 = sphi 0, %s104
      %s108 = sphi 0, %s107
      %s124 = sphi 0, %s108
      %s128 = sphi 0, %s128
      %s130 = sphi 0, %s128
      %s131 = sphi 0, %s130
      %s145 = sphi 0, %s131
      %s149 = sphi 0, %s149
      %s151 = sphi 0, %s149
      %s152 = sphi 0, %s151
      %s166 = sphi 0, %s152
      %s170 = sphi 0, %s170
      %s172 = sphi 0, %s170
      %s173 = sphi 0, %s172
      %s187 = sphi 0, %s173
      %s191 = sphi 0, %s191
      %s193 = sphi 0, %s191
      %s194 = sphi 0, %s193
      %s208 = sphi 0, %s194
      %s212 = sphi 0, %s212
      %s214 = sphi 0, %s212
      %s215 = sphi 0, %s214
      %s229 = sphi 0, %s215
    $region4: #{lstm_encoder_forward.1} parent=1 // loop_header_branch
      %24 = sbr.rel (%p22) target = $region8
    $region5: #{lstm_encoder_forward.1} parent=1 // loop_body
      %s26 = ssub.s32 %s21, 1
      %s27 = ssub.s32 %s21, 2
      %s28 = sadd.s32 %s21, 1
      %s30 = sadd.s32 %s29, 1
      %p33 = scmp.eq.s32.totalorder %s21, 1
      %p34 = scmp.ne.s32.totalorder %s29, %s31
      %p35 = scmp.eq.s32.totalorder %s21, 0
      %p36 = por %p34, %p35
      %p37 = scmp.ne.s32.totalorder %s29, %s31
      %p38 = scmp.eq.s32.totalorder %s26, 1
      %p39 = por %p37, %p38
      %p40 = scmp.ne.s32.totalorder %s31, %s32
      %p41 = scmp.eq.s32.totalorder %s26, 0
      %p42 = por %p40, %p41
      %p43 = scmp.ne.s32.totalorder %s31, %s32
      %p44 = scmp.eq.s32.totalorder %s27, 1
      %p45 = por %p43, %p44
      %p47 = scmp.ne.s32.totalorder %s32, %s46
      %p48 = scmp.eq.s32.totalorder %s27, 0
      %p49 = por %p47, %p48
      %s50 = ssub.s32 %s21, %s28
      %p51 = scmp.eq.s32.totalorder %s50, 0
      %s53 = sadd.s32 %s52, 1
      %s54 = scalar_select %p51, %s52, %s53
      %p57 = pneg %p51
      %p58 = scmp.eq.s32.totalorder %s21, 1
      %p59 = por %p57, %p58
      %p60 = scmp.ne.s32.totalorder %s52, %s55
      %p61 = scmp.eq.s32.totalorder %s21, 0
      %p62 = por %p60, %p61
      %p63 = scmp.ne.s32.totalorder %s52, %s55
      %p64 = scmp.eq.s32.totalorder %s26, 1
      %p65 = por %p63, %p64
      %p66 = scmp.ne.s32.totalorder %s55, %s56
      %p67 = scmp.eq.s32.totalorder %s26, 0
      %p68 = por %p66, %p67
      %p69 = scmp.ne.s32.totalorder %s55, %s56
      %p70 = scmp.eq.s32.totalorder %s27, 1
      %p71 = por %p69, %p70
      %p73 = scmp.ne.s32.totalorder %s56, %s72
      %p74 = scmp.eq.s32.totalorder %s27, 0
      %p75 = por %p73, %p74
      %s76 = ssub.s32 %s21, %s28
      %p77 = scmp.eq.s32.totalorder %s76, 0
      %s79 = sadd.s32 %s78, 1
      %s80 = scalar_select %p77, %s78, %s79
      %p83 = pneg %p77
      %p84 = scmp.eq.s32.totalorder %s21, 1
      %p85 = por %p83, %p84
      %p86 = scmp.ne.s32.totalorder %s78, %s81
      %p87 = scmp.eq.s32.totalorder %s21, 0
      %p88 = por %p86, %p87
      %p89 = scmp.ne.s32.totalorder %s78, %s81
      %p90 = scmp.eq.s32.totalorder %s26, 1
      %p91 = por %p89, %p90
      %p92 = scmp.ne.s32.totalorder %s81, %s82
      %p93 = scmp.eq.s32.totalorder %s26, 0
      %p94 = por %p92, %p93
      %p95 = scmp.ne.s32.totalorder %s81, %s82
      %p96 = scmp.eq.s32.totalorder %s27, 1
      %p97 = por %p95, %p96
      %p99 = scmp.ne.s32.totalorder %s82, %s98
      %p100 = scmp.eq.s32.totalorder %s27, 0
      %p101 = por %p99, %p100
      %s102 = ssub.s32 %s21, %s28
      %p103 = scmp.eq.s32.totalorder %s102, 0
      %s105 = sadd.s32 %s104, 1
      %s106 = scalar_select %p103, %s104, %s105
      %p109 = pneg %p103
      %p110 = scmp.eq.s32.totalorder %s21, 1
      %p111 = por %p109, %p110
      %p112 = scmp.ne.s32.totalorder %s104, %s107
      %p113 = scmp.eq.s32.totalorder %s21, 0
      %p114 = por %p112, %p113
      %p115 = scmp.ne.s32.totalorder %s104, %s107
      %p116 = scmp.eq.s32.totalorder %s26, 1
      %p117 = por %p115, %p116
      %p118 = scmp.ne.s32.totalorder %s107, %s108
      %p119 = scmp.eq.s32.totalorder %s26, 0
      %p120 = por %p118, %p119
      %p121 = scmp.ne.s32.totalorder %s107, %s108
      %p122 = scmp.eq.s32.totalorder %s27, 1
      %p123 = por %p121, %p122
      %p125 = scmp.ne.s32.totalorder %s108, %s124
      %p126 = scmp.eq.s32.totalorder %s27, 0
      %p127 = por %p125, %p126
      %s129 = sadd.s32 %s128, 1
      %p132 = scmp.eq.s32.totalorder %s21, 1
      %p133 = scmp.ne.s32.totalorder %s128, %s130
      %p134 = scmp.eq.s32.totalorder %s21, 0
      %p135 = por %p133, %p134
      %p136 = scmp.ne.s32.totalorder %s128, %s130
      %p137 = scmp.eq.s32.totalorder %s26, 1
      %p138 = por %p136, %p137
      %p139 = scmp.ne.s32.totalorder %s130, %s131
      %p140 = scmp.eq.s32.totalorder %s26, 0
      %p141 = por %p139, %p140
      %p142 = scmp.ne.s32.totalorder %s130, %s131
      %p143 = scmp.eq.s32.totalorder %s27, 1
      %p144 = por %p142, %p143
      %p146 = scmp.ne.s32.totalorder %s131, %s145
      %p147 = scmp.eq.s32.totalorder %s27, 0
      %p148 = por %p146, %p147
      %s150 = sadd.s32 %s149, 1
      %p153 = scmp.eq.s32.totalorder %s21, 1
      %p154 = scmp.ne.s32.totalorder %s149, %s151
      %p155 = scmp.eq.s32.totalorder %s21, 0
      %p156 = por %p154, %p155
      %p157 = scmp.ne.s32.totalorder %s149, %s151
      %p158 = scmp.eq.s32.totalorder %s26, 1
      %p159 = por %p157, %p158
      %p160 = scmp.ne.s32.totalorder %s151, %s152
      %p161 = scmp.eq.s32.totalorder %s26, 0
      %p162 = por %p160, %p161
      %p163 = scmp.ne.s32.totalorder %s151, %s152
      %p164 = scmp.eq.s32.totalorder %s27, 1
      %p165 = por %p163, %p164
      %p167 = scmp.ne.s32.totalorder %s152, %s166
      %p168 = scmp.eq.s32.totalorder %s27, 0
      %p169 = por %p167, %p168
      %s171 = sadd.s32 %s170, 1
      %p174 = scmp.eq.s32.totalorder %s21, 1
      %p175 = scmp.ne.s32.totalorder %s170, %s172
      %p176 = scmp.eq.s32.totalorder %s21, 0
      %p177 = por %p175, %p176
      %p178 = scmp.ne.s32.totalorder %s170, %s172
      %p179 = scmp.eq.s32.totalorder %s26, 1
      %p180 = por %p178, %p179
      %p181 = scmp.ne.s32.totalorder %s172, %s173
      %p182 = scmp.eq.s32.totalorder %s26, 0
      %p183 = por %p181, %p182
      %p184 = scmp.ne.s32.totalorder %s172, %s173
      %p185 = scmp.eq.s32.totalorder %s27, 1
      %p186 = por %p184, %p185
      %p188 = scmp.ne.s32.totalorder %s173, %s187
      %p189 = scmp.eq.s32.totalorder %s27, 0
      %p190 = por %p188, %p189
      %s192 = sadd.s32 %s191, 1
      %p195 = scmp.eq.s32.totalorder %s21, 1
      %p196 = scmp.ne.s32.totalorder %s191, %s193
      %p197 = scmp.eq.s32.totalorder %s21, 0
      %p198 = por %p196, %p197
      %p199 = scmp.ne.s32.totalorder %s191, %s193
      %p200 = scmp.eq.s32.totalorder %s26, 1
      %p201 = por %p199, %p200
      %p202 = scmp.ne.s32.totalorder %s193, %s194
      %p203 = scmp.eq.s32.totalorder %s26, 0
      %p204 = por %p202, %p203
      %p205 = scmp.ne.s32.totalorder %s193, %s194
      %p206 = scmp.eq.s32.totalorder %s27, 1
      %p207 = por %p205, %p206
      %p209 = scmp.ne.s32.totalorder %s194, %s208
      %p210 = scmp.eq.s32.totalorder %s27, 0
      %p211 = por %p209, %p210
      %s213 = sadd.s32 %s212, 1
      %p216 = scmp.eq.s32.totalorder %s21, 1
      %p217 = scmp.ne.s32.totalorder %s212, %s214
      %p218 = scmp.eq.s32.totalorder %s21, 0
      %p219 = por %p217, %p218
      %p220 = scmp.ne.s32.totalorder %s212, %s214
      %p221 = scmp.eq.s32.totalorder %s26, 1
      %p222 = por %p220, %p221
      %p223 = scmp.ne.s32.totalorder %s214, %s215
      %p224 = scmp.eq.s32.totalorder %s26, 0
      %p225 = por %p223, %p224
      %p226 = scmp.ne.s32.totalorder %s214, %s215
      %p227 = scmp.eq.s32.totalorder %s27, 1
      %p228 = por %p226, %p227
      %p230 = scmp.ne.s32.totalorder %s215, %s229
      %p231 = scmp.eq.s32.totalorder %s27, 0
      %p232 = por %p230, %p231
      %p233 = scmp.le.s32.totalorder 1, %s21
      %p234 = scmp.lt.s32.totalorder %s21, 3
      %p235 = pnand %p233, %p234
      %p236 = pneg %p235
      // Predicated region
      $region9: #{lstm_encoder_forward.1} parent=5 // pred_check
        _
      $region10: #{lstm_encoder_forward.1} parent=5 // pred_check_branch
        %238 = sbr.rel (%p235) target = $region12
      $region11: #{lstm_encoder_forward.1} parent=5 // pred_region
        %s239 = ssub.s32 %s21, 1
        // Predicated region
        $region13: #{lstm_encoder_forward.1} parent=11 // pred_check
          %p240 = pneg %p42
        $region14: #{lstm_encoder_forward.1} parent=11 // pred_check_branch
          %242 = sbr.rel (%p240) target = $region16
        $region15: #{lstm_encoder_forward.1} parent=11 // pred_region
          _
        $region16: #{lstm_encoder_forward.1} parent=11 // pred_fallthru
          _
        // Predicated region
        $region17: #{lstm_encoder_forward.1} parent=11 // pred_check
          %p243 = pneg %p141
        $region18: #{lstm_encoder_forward.1} parent=11 // pred_check_branch
          %245 = sbr.rel (%p243) target = $region20
        $region19: #{lstm_encoder_forward.1} parent=11 // pred_region
          _
        $region20: #{lstm_encoder_forward.1} parent=11 // pred_fallthru
          _
        // Predicated region
        $region21: #{lstm_encoder_forward.1} parent=11 // pred_check
          %p246 = pneg %p162
        $region22: #{lstm_encoder_forward.1} parent=11 // pred_check_branch
          %248 = sbr.rel (%p246) target = $region24
        $region23: #{lstm_encoder_forward.1} parent=11 // pred_region
          _
        $region24: #{lstm_encoder_forward.1} parent=11 // pred_fallthru
          _
      $region12: #{lstm_encoder_forward.1} parent=5 // pred_fallthru
        _
      %p249 = scmp.lt.s32.totalorder %s21, 2
      // Predicated region
      $region25: #{lstm_encoder_forward.1} parent=5 // pred_check
        %p250 = pneg %p249
      $region26: #{lstm_encoder_forward.1} parent=5 // pred_check_branch
        %252 = sbr.rel (%p250) target = $region28
      $region27: #{lstm_encoder_forward.1} parent=5 // pred_region
        // Predicated region
        $region29: #{lstm_encoder_forward.1} parent=27 // pred_check
          %p253 = pneg %p62
        $region30: #{lstm_encoder_forward.1} parent=27 // pred_check_branch
          %255 = sbr.rel (%p253) target = $region32
        $region31: #{lstm_encoder_forward.1} parent=27 // pred_region
          %s256 = sand.u32 %s52, 1
          %s257 = scalar_lea.sflag [#allocation7], %s256
          %s258 = sand.u32 %s52, 1
          %s259 = smul.addr %s258, 512
          %s260 = scalar_lea.vmem [#allocation6], %s259
          %s262 = ssub.s32 8192, 8192
          %263 = vsyncadd %s257, %s262
          %s264 = smul.addr %s21, 64
          %s265 = smul.addr %s264, 128
          %s266 = scalar_lea.hbm %s1, %s265
          %s267 = sshll.u32 %s260, 4
          %s268 = int_to_ptr.vmem [resolvable:$true] %s267
          %273 = dma.hbm_to_vmem [thread:$0]  %s266, 8192, %s268, %s257, 512, 512, 32
        $region32: #{lstm_encoder_forward.1} parent=27 // pred_fallthru
          _
        // Predicated region
        $region33: #{lstm_encoder_forward.1} parent=27 // pred_check
          %p274 = pneg %p88
        $region34: #{lstm_encoder_forward.1} parent=27 // pred_check_branch
          %276 = sbr.rel (%p274) target = $region36
        $region35: #{lstm_encoder_forward.1} parent=27 // pred_region
          %s277 = sand.u32 %s78, 1
          %s278 = scalar_lea.sflag [#allocation9], %s277
          %s279 = sand.u32 %s78, 1
          %s280 = smul.addr %s279, 512
          %s281 = scalar_lea.vmem [#allocation8], %s280
          %s283 = ssub.s32 8192, 8192
          %284 = vsyncadd %s278, %s283
          %s285 = smul.addr %s21, 64
          %s286 = smul.addr %s285, 128
          %s287 = scalar_lea.hbm %s2, %s286
          %s288 = sshll.u32 %s281, 4
          %s289 = int_to_ptr.vmem [resolvable:$true] %s288
          %294 = dma.hbm_to_vmem [thread:$0]  %s287, 8192, %s289, %s278, 512, 512, 32
        $region36: #{lstm_encoder_forward.1} parent=27 // pred_fallthru
          _
        // Predicated region
        $region37: #{lstm_encoder_forward.1} parent=27 // pred_check
          %p295 = pneg %p114
        $region38: #{lstm_encoder_forward.1} parent=27 // pred_check_branch
          %297 = sbr.rel (%p295) target = $region40
        $region39: #{lstm_encoder_forward.1} parent=27 // pred_region
          %p298 = scmp.lt.s32.totalorder %s21, 1
          %s299 = scalar_select %p298, %s21, 1
          %s300 = smul.addr %s299, 4
          %s301 = scalar_lea.vmem %s3, %s300
        $region40: #{lstm_encoder_forward.1} parent=27 // pred_fallthru
          _
      $region28: #{lstm_encoder_forward.1} parent=5 // pred_fallthru
        _
      %p302 = scmp.le.s32.totalorder 1, %s21
      %p303 = scmp.lt.s32.totalorder %s21, 3
      %p304 = pnand %p302, %p303
      %p305 = pneg %p304
      // Predicated region
      $region41: #{lstm_encoder_forward.1} parent=5 // pred_check
        _
      $region42: #{lstm_encoder_forward.1} parent=5 // pred_check_branch
        %307 = sbr.rel (%p304) target = $region44
      $region43: #{lstm_encoder_forward.1} parent=5 // pred_region
        %s308 = ssub.s32 %s21, 1
        %s309 = sand.u32 %s55, 1
        %s310 = scalar_lea.sflag [#allocation7], %s309
        %s311 = sand.u32 %s55, 1
        %s312 = smul.addr %s311, 512
        %s313 = scalar_lea.vmem [#allocation6], %s312
        // Predicated region
        $region45: #{lstm_encoder_forward.1} parent=43 // pred_check
          %p314 = pneg %p68
        $region46: #{lstm_encoder_forward.1} parent=43 // pred_check_branch
          %316 = sbr.rel (%p314) target = $region48
        $region47: #{lstm_encoder_forward.1} parent=43 // pred_region
          %317 = dma.done %s310, 8192
        $region48: #{lstm_encoder_forward.1} parent=43 // pred_fallthru
          _
        %s318 = sand.u32 %s81, 1
        %s319 = scalar_lea.sflag [#allocation9], %s318
        %s320 = sand.u32 %s81, 1
        %s321 = smul.addr %s320, 512
        %s322 = scalar_lea.vmem [#allocation8], %s321
        // Predicated region
        $region49: #{lstm_encoder_forward.1} parent=43 // pred_check
          %p323 = pneg %p94
        $region50: #{lstm_encoder_forward.1} parent=43 // pred_check_branch
          %325 = sbr.rel (%p323) target = $region52
        $region51: #{lstm_encoder_forward.1} parent=43 // pred_region
          %326 = dma.done %s319, 8192
        $region52: #{lstm_encoder_forward.1} parent=43 // pred_fallthru
          _
        %p327 = pneg %p42
        %p328 = pneg %p39
        %s329 = sand.u32 %s55, 1
        %s330 = scalar_lea.sflag [#allocation7], %s329
        %s331 = sand.u32 %s55, 1
        %s332 = smul.addr %s331, 512
        %s333 = scalar_lea.vmem [#allocation6], %s332
        %p334 = pneg %p68
        %p335 = pneg %p65
        %s336 = sand.u32 %s81, 1
        %s337 = scalar_lea.sflag [#allocation9], %s336
        %s338 = sand.u32 %s81, 1
        %s339 = smul.addr %s338, 512
        %s340 = scalar_lea.vmem [#allocation8], %s339
        %p341 = pneg %p94
        %p342 = pneg %p91
        %p343 = scmp.lt.s32.totalorder %s26, 1
        %s344 = scalar_select %p343, %s26, 1
        %s345 = smul.addr %s344, 4
        %s346 = scalar_lea.vmem %s3, %s345
        %p347 = pneg %p120
        %p348 = pneg %p117
        %p349 = pneg %p141
        %p350 = pneg %p138
        %p351 = pneg %p162
        %p352 = pneg %p159
        %p353 = pneg %p183
        %p354 = pneg %p180
        %p355 = pneg %p204
        %p356 = pneg %p201
        %p357 = pneg %p225
        %p358 = pneg %p222
        %p359 = scmp.lt.s32.totalorder %s26, 1
        %s360 = scalar_select %p359, %s26, 1
        %s361 = smul.addr %s360, 4
        %s362 = scalar_lea.vmem %s3, %s361
        %p363 = scmp.eq.s32.totalorder %s26, 0
        // Predicated region
        $region53: #{lstm_encoder_forward.1} parent=43 // pred_check
          %p364 = pneg %p363
        $region54: #{lstm_encoder_forward.1} parent=43 // pred_check_branch
          %366 = sbr.rel (%p364) target = $region56
        $region55: #{lstm_encoder_forward.1} parent=43 // pred_region
          %v367 = vld [vmem:[%s4] sm:$0xff]
          %368 = vst [vmem:[#allocation4] sm:$0xff] %v367
          %v369 = vld [vmem:[%s5] sm:$0xff]
          %370 = vst [vmem:[#allocation5] sm:$0xff] %v369
          %v371 = vld [vmem:[%s0] sm:$0xff]
          %v372 = vld [vmem:[%s0 + $0x8] sm:$0xff]
          %v373 = vld [vmem:[%s0 + $0x10] sm:$0xff]
          %v374 = vld [vmem:[%s0 + $0x18] sm:$0xff]
          %v375 = vld [vmem:[%s0 + $0x20] sm:$0xff]
          %v376 = vld [vmem:[%s0 + $0x28] sm:$0xff]
          %v377 = vld [vmem:[%s0 + $0x30] sm:$0xff]
          %v378 = vld [vmem:[%s0 + $0x38] sm:$0xff]
          %v379 = vld [vmem:[%s313] sm:$0xff]
          %v380 = vld [vmem:[%s313 + $0x8] sm:$0xff]
          %v381 = vld [vmem:[%s313 + $0x10] sm:$0xff]
          %v382 = vld [vmem:[%s313 + $0x18] sm:$0xff]
          %v383 = vld [vmem:[%s313 + $0x20] sm:$0xff]
          %v384 = vld [vmem:[%s313 + $0x28] sm:$0xff]
          %v385 = vld [vmem:[%s313 + $0x30] sm:$0xff]
          %v386 = vld [vmem:[%s313 + $0x38] sm:$0xff]
          %v387 = vld [vmem:[%s313 + $0x40] sm:$0xff]
          %v388 = vld [vmem:[%s313 + $0x48] sm:$0xff]
          %v389 = vld [vmem:[%s313 + $0x50] sm:$0xff]
          %v390 = vld [vmem:[%s313 + $0x58] sm:$0xff]
          %v391 = vld [vmem:[%s313 + $0x60] sm:$0xff]
          %v392 = vld [vmem:[%s313 + $0x68] sm:$0xff]
          %v393 = vld [vmem:[%s313 + $0x70] sm:$0xff]
          %v394 = vld [vmem:[%s313 + $0x78] sm:$0xff]
          %v395 = vld [vmem:[%s313 + $0x80] sm:$0xff]
          %v396 = vld [vmem:[%s313 + $0x88] sm:$0xff]
          %v397 = vld [vmem:[%s313 + $0x90] sm:$0xff]
          %v398 = vld [vmem:[%s313 + $0x98] sm:$0xff]
          %v399 = vld [vmem:[%s313 + $0xa0] sm:$0xff]
          %v400 = vld [vmem:[%s313 + $0xa8] sm:$0xff]
          %v401 = vld [vmem:[%s313 + $0xb0] sm:$0xff]
          %v402 = vld [vmem:[%s313 + $0xb8] sm:$0xff]
          %v403 = vld [vmem:[%s313 + $0xc0] sm:$0xff]
          %v404 = vld [vmem:[%s313 + $0xc8] sm:$0xff]
          %v405 = vld [vmem:[%s313 + $0xd0] sm:$0xff]
          %v406 = vld [vmem:[%s313 + $0xd8] sm:$0xff]
          %v407 = vld [vmem:[%s313 + $0xe0] sm:$0xff]
          %v408 = vld [vmem:[%s313 + $0xe8] sm:$0xff]
          %v409 = vld [vmem:[%s313 + $0xf0] sm:$0xff]
          %v410 = vld [vmem:[%s313 + $0xf8] sm:$0xff]
          %v411 = vld [vmem:[%s313 + $0x100] sm:$0xff]
          %v412 = vld [vmem:[%s313 + $0x108] sm:$0xff]
          %v413 = vld [vmem:[%s313 + $0x110] sm:$0xff]
          %v414 = vld [vmem:[%s313 + $0x118] sm:$0xff]
          %v415 = vld [vmem:[%s313 + $0x120] sm:$0xff]
          %v416 = vld [vmem:[%s313 + $0x128] sm:$0xff]
          %v417 = vld [vmem:[%s313 + $0x130] sm:$0xff]
          %v418 = vld [vmem:[%s313 + $0x138] sm:$0xff]
          %v419 = vld [vmem:[%s313 + $0x140] sm:$0xff]
          %v420 = vld [vmem:[%s313 + $0x148] sm:$0xff]
          %v421 = vld [vmem:[%s313 + $0x150] sm:$0xff]
          %v422 = vld [vmem:[%s313 + $0x158] sm:$0xff]
          %v423 = vld [vmem:[%s313 + $0x160] sm:$0xff]
          %v424 = vld [vmem:[%s313 + $0x168] sm:$0xff]
          %v425 = vld [vmem:[%s313 + $0x170] sm:$0xff]
          %v426 = vld [vmem:[%s313 + $0x178] sm:$0xff]
          %v427 = vld [vmem:[%s313 + $0x180] sm:$0xff]
          %v428 = vld [vmem:[%s313 + $0x188] sm:$0xff]
          %v429 = vld [vmem:[%s313 + $0x190] sm:$0xff]
          %v430 = vld [vmem:[%s313 + $0x198] sm:$0xff]
          %v431 = vld [vmem:[%s313 + $0x1a0] sm:$0xff]
          %v432 = vld [vmem:[%s313 + $0x1a8] sm:$0xff]
          %v433 = vld [vmem:[%s313 + $0x1b0] sm:$0xff]
          %v434 = vld [vmem:[%s313 + $0x1b8] sm:$0xff]
          %v435 = vld [vmem:[%s313 + $0x1c0] sm:$0xff]
          %v436 = vld [vmem:[%s313 + $0x1c8] sm:$0xff]
          %v437 = vld [vmem:[%s313 + $0x1d0] sm:$0xff]
          %v438 = vld [vmem:[%s313 + $0x1d8] sm:$0xff]
          %v439 = vld [vmem:[%s313 + $0x1e0] sm:$0xff]
          %v440 = vld [vmem:[%s313 + $0x1e8] sm:$0xff]
          %v441 = vld [vmem:[%s313 + $0x1f0] sm:$0xff]
          %v442 = vld [vmem:[%s313 + $0x1f8] sm:$0xff]
          %v443 = vld [vmem:[%s362] sm:$0xf]
          %v445 = vlaneseq
          %v446 = vshrl.u32 %v445, 7
          %v447 = vsub.s32 0, %v446
          %v448 = vrot.slane %v443, %v447
          %v449 = vlaneseq
          %v450 = vshrl.u32 %v449, 7
          %v451 = vsub.s32 1, %v450
          %v452 = vrot.slane %v443, %v451
          %v453 = vlaneseq
          %v454 = vshrl.u32 %v453, 7
          %v455 = vsub.s32 2, %v454
          %v456 = vrot.slane %v443, %v455
          %v457 = vlaneseq
          %v458 = vshrl.u32 %v457, 7
          %v459 = vsub.s32 3, %v458
          %v460 = vrot.slane %v443, %v459
          %465 = vmatprep.subr.mxu0 %v380
          %466 = vmatpush1.msra.mxu0 %v379
          %467 = vmatprep.subr.mxu0 %v384
          %468 = vmatpush1.msra.mxu0 %v383
          %469 = vmatprep.subr.mxu0 %v388
          %470 = vmatpush1.msra.mxu0 %v387
          %471 = vmatprep.subr.mxu0 %v392
          %472 = vmatpush1.msra.mxu0 %v391
          %473 = vmatprep.subr.mxu0 %v396
          %474 = vmatpush1.msra.mxu0 %v395
          %475 = vmatprep.subr.mxu0 %v400
          %476 = vmatpush1.msra.mxu0 %v399
          %477 = vmatprep.subr.mxu0 %v404
          %478 = vmatpush1.msra.mxu0 %v403
          %479 = vmatprep.subr.mxu0 %v408
          %480 = vmatpush1.msra.mxu0 %v407
          %481 = vmatprep.subr.mxu0 %v412
          %482 = vmatpush1.msra.mxu0 %v411
          %483 = vmatprep.subr.mxu0 %v416
          %484 = vmatpush1.msra.mxu0 %v415
          %485 = vmatprep.subr.mxu0 %v420
          %486 = vmatpush1.msra.mxu0 %v419
          %487 = vmatprep.subr.mxu0 %v424
          %488 = vmatpush1.msra.mxu0 %v423
          %489 = vmatprep.subr.mxu0 %v428
          %490 = vmatpush1.msra.mxu0 %v427
          %491 = vmatprep.subr.mxu0 %v432
          %492 = vmatpush1.msra.mxu0 %v431
          %493 = vmatprep.subr.mxu0 %v436
          %494 = vmatpush1.msra.mxu0 %v435
          %495 = vmatprep.subr.mxu0 %v440
          %496 = vmatpush1.msra.mxu0 %v439
          %497 = vmatprep.subr.mxu0 0.0
          %498 = vmatpush1.msra.mxu0 0.0
          %499 = vmatprep.subr.mxu0 0.0
          %500 = vmatpush1.msra.mxu0 0.0
          %501 = vmatprep.subr.mxu0 0.0
          %502 = vmatpush1.msra.mxu0 0.0
          %503 = vmatprep.subr.mxu0 0.0
          %504 = vmatpush1.msra.mxu0 0.0
          %505 = vmatprep.subr.mxu0 0.0
          %506 = vmatpush1.msra.mxu0 0.0
          %507 = vmatprep.subr.mxu0 0.0
          %508 = vmatpush1.msra.mxu0 0.0
          %509 = vmatprep.subr.mxu0 0.0
          %510 = vmatpush1.msra.mxu0 0.0
          %511 = vmatprep.subr.mxu0 0.0
          %512 = vmatpush1.msra.mxu0 0.0
          %513 = vmatprep.subr.mxu0 0.0
          %514 = vmatpush1.msra.mxu0 0.0
          %515 = vmatprep.subr.mxu0 0.0
          %516 = vmatpush1.msra.mxu0 0.0
          %517 = vmatprep.subr.mxu0 0.0
          %518 = vmatpush1.msra.mxu0 0.0
          %519 = vmatprep.subr.mxu0 0.0
          %520 = vmatpush1.msra.mxu0 0.0
          %521 = vmatprep.subr.mxu0 0.0
          %522 = vmatpush1.msra.mxu0 0.0
          %523 = vmatprep.subr.mxu0 0.0
          %524 = vmatpush1.msra.mxu0 0.0
          %525 = vmatprep.subr.mxu0 0.0
          %526 = vmatpush1.msra.mxu0 0.0
          %527 = vmatprep.subr.mxu0 0.0
          %528 = vmatpush1.msra.mxu0 0.0
          %529 = vmatprep.mubr.f32.mxu0 0.0
          %530 = vmatmul.mubr.f32.gmra.mrb[0].mxu0 %v371
          %v531 = vpop.f32.mrb[0].mxu0
          %v532 = vadd.f32 %v448, %v531
          %v533 = vpop.f32.mrb[0].mxu0
          %v534 = vadd.f32 %v452, %v533
          %535 = vmatprep.mubr.f32.mxu0 0.0
          %536 = vmatmul.mubr.f32.gmra.mrb[0].mxu0 %v372
          %v537 = vpop.f32.mrb[0].mxu0
          %v538 = vadd.f32 %v448, %v537
          %v539 = vpop.f32.mrb[0].mxu0
          %v540 = vadd.f32 %v452, %v539
          %541 = vmatprep.mubr.f32.mxu0 0.0
          %542 = vmatmul.mubr.f32.gmra.mrb[0].mxu0 %v373
          %v543 = vpop.f32.mrb[0].mxu0
          %v544 = vadd.f32 %v448, %v543
          %v545 = vpop.f32.mrb[0].mxu0
          %v546 = vadd.f32 %v452, %v545
          %547 = vmatprep.mubr.f32.mxu0 0.0
          %548 = vmatmul.mubr.f32.gmra.mrb[0].mxu0 %v374
          %v549 = vpop.f32.mrb[0].mxu0
          %v550 = vadd.f32 %v448, %v549
          %v551 = vpop.f32.mrb[0].mxu0
          %v552 = vadd.f32 %v452, %v551
          %553 = vmatprep.mubr.f32.mxu0 0.0
          %554 = vmatmul.mubr.f32.gmra.mrb[0].mxu0 %v375
          %v555 = vpop.f32.mrb[0].mxu0
          %v556 = vadd.f32 %v448, %v555
          %v557 = vpop.f32.mrb[0].mxu0
          %v558 = vadd.f32 %v452, %v557
          %559 = vmatprep.mubr.f32.mxu0 0.0
          %560 = vmatmul.mubr.f32.gmra.mrb[0].mxu0 %v376
          %v561 = vpop.f32.mrb[0].mxu0
          %v562 = vadd.f32 %v448, %v561
          %v563 = vpop.f32.mrb[0].mxu0
          %v564 = vadd.f32 %v452, %v563
          %565 = vmatprep.mubr.f32.mxu0 0.0
          %566 = vmatmul.mubr.f32.gmra.mrb[0].mxu0 %v377
          %v567 = vpop.f32.mrb[0].mxu0
          %v568 = vadd.f32 %v448, %v567
          %v569 = vpop.f32.mrb[0].mxu0
          %v570 = vadd.f32 %v452, %v569
          %571 = vmatprep.mubr.f32.mxu0 0.0
          %572 = vmatmul.mubr.f32.gmra.mrb[0].mxu0 %v378
          %v573 = vpop.f32.mrb[0].mxu0
          %v574 = vadd.f32 %v448, %v573
          %v575 = vpop.f32.mrb[0].mxu0
          %v576 = vadd.f32 %v452, %v575
          %577 = vdwg.mxu0
          %578 = vmatprep.subr.mxu0 %v382
          %579 = vmatpush1.msra.mxu0 %v381
          %580 = vmatprep.subr.mxu0 %v386
          %581 = vmatpush1.msra.mxu0 %v385
          %582 = vmatprep.subr.mxu0 %v390
          %583 = vmatpush1.msra.mxu0 %v389
          %584 = vmatprep.subr.mxu0 %v394
          %585 = vmatpush1.msra.mxu0 %v393
          %586 = vmatprep.subr.mxu0 %v398
          %587 = vmatpush1.msra.mxu0 %v397
          %588 = vmatprep.subr.mxu0 %v402
          %589 = vmatpush1.msra.mxu0 %v401
          %590 = vmatprep.subr.mxu0 %v406
          %591 = vmatpush1.msra.mxu0 %v405
          %592 = vmatprep.subr.mxu0 %v410
          %593 = vmatpush1.msra.mxu0 %v409
          %594 = vmatprep.subr.mxu0 %v414
          %595 = vmatpush1.msra.mxu0 %v413
          %596 = vmatprep.subr.mxu0 %v418
          %597 = vmatpush1.msra.mxu0 %v417
          %598 = vmatprep.subr.mxu0 %v422
          %599 = vmatpush1.msra.mxu0 %v421
          %600 = vmatprep.subr.mxu0 %v426
          %601 = vmatpush1.msra.mxu0 %v425
          %602 = vmatprep.subr.mxu0 %v430
          %603 = vmatpush1.msra.mxu0 %v429
          %604 = vmatprep.subr.mxu0 %v434
          %605 = vmatpush1.msra.mxu0 %v433
          %606 = vmatprep.subr.mxu0 %v438
          %607 = vmatpush1.msra.mxu0 %v437
          %608 = vmatprep.subr.mxu0 %v442
          %609 = vmatpush1.msra.mxu0 %v441
          %610 = vmatprep.subr.mxu0 0.0
          %611 = vmatpush1.msra.mxu0 0.0
          %612 = vmatprep.subr.mxu0 0.0
          %613 = vmatpush1.msra.mxu0 0.0
          %614 = vmatprep.subr.mxu0 0.0
          %615 = vmatpush1.msra.mxu0 0.0
          %616 = vmatprep.subr.mxu0 0.0
          %617 = vmatpush1.msra.mxu0 0.0
          %618 = vmatprep.subr.mxu0 0.0
          %619 = vmatpush1.msra.mxu0 0.0
          %620 = vmatprep.subr.mxu0 0.0
          %621 = vmatpush1.msra.mxu0 0.0
          %622 = vmatprep.subr.mxu0 0.0
          %623 = vmatpush1.msra.mxu0 0.0
          %624 = vmatprep.subr.mxu0 0.0
          %625 = vmatpush1.msra.mxu0 0.0
          %626 = vmatprep.subr.mxu0 0.0
          %627 = vmatpush1.msra.mxu0 0.0
          %628 = vmatprep.subr.mxu0 0.0
          %629 = vmatpush1.msra.mxu0 0.0
          %630 = vmatprep.subr.mxu0 0.0
          %631 = vmatpush1.msra.mxu0 0.0
          %632 = vmatprep.subr.mxu0 0.0
          %633 = vmatpush1.msra.mxu0 0.0
          %634 = vmatprep.subr.mxu0 0.0
          %635 = vmatpush1.msra.mxu0 0.0
          %636 = vmatprep.subr.mxu0 0.0
          %637 = vmatpush1.msra.mxu0 0.0
          %638 = vmatprep.subr.mxu0 0.0
          %639 = vmatpush1.msra.mxu0 0.0
          %640 = vmatprep.subr.mxu0 0.0
          %641 = vmatpush1.msra.mxu0 0.0
          %642 = vmatprep.mubr.f32.mxu0 0.0
          %643 = vmatmul.mubr.f32.gmra.mrb[0].mxu0 %v371
          %v644 = vpop.f32.mrb[0].mxu0
          %v645 = vadd.f32 %v456, %v644
          %v646 = vpop.f32.mrb[0].mxu0
          %v647 = vadd.f32 %v460, %v646
          %648 = vmatprep.mubr.f32.mxu0 0.0
          %649 = vmatmul.mubr.f32.gmra.mrb[0].mxu0 %v372
          %v650 = vpop.f32.mrb[0].mxu0
          %v651 = vadd.f32 %v456, %v650
          %v652 = vpop.f32.mrb[0].mxu0
          %v653 = vadd.f32 %v460, %v652
          %654 = vmatprep.mubr.f32.mxu0 0.0
          %655 = vmatmul.mubr.f32.gmra.mrb[0].mxu0 %v373
          %v656 = vpop.f32.mrb[0].mxu0
          %v657 = vadd.f32 %v456, %v656
          %v658 = vpop.f32.mrb[0].mxu0
          %v659 = vadd.f32 %v460, %v658
          %660 = vmatprep.mubr.f32.mxu0 0.0
          %661 = vmatmul.mubr.f32.gmra.mrb[0].mxu0 %v374
          %v662 = vpop.f32.mrb[0].mxu0
          %v663 = vadd.f32 %v456, %v662
          %v664 = vpop.f32.mrb[0].mxu0
          %v665 = vadd.f32 %v460, %v664
          %666 = vmatprep.mubr.f32.mxu0 0.0
          %667 = vmatmul.mubr.f32.gmra.mrb[0].mxu0 %v375
          %v668 = vpop.f32.mrb[0].mxu0
          %v669 = vadd.f32 %v456, %v668
          %v670 = vpop.f32.mrb[0].mxu0
          %v671 = vadd.f32 %v460, %v670
          %672 = vmatprep.mubr.f32.mxu0 0.0
          %673 = vmatmul.mubr.f32.gmra.mrb[0].mxu0 %v376
          %v674 = vpop.f32.mrb[0].mxu0
          %v675 = vadd.f32 %v456, %v674
          %v676 = vpop.f32.mrb[0].mxu0
          %v677 = vadd.f32 %v460, %v676
          %678 = vmatprep.mubr.f32.mxu0 0.0
          %679 = vmatmul.mubr.f32.gmra.mrb[0].mxu0 %v377
          %v680 = vpop.f32.mrb[0].mxu0
          %v681 = vadd.f32 %v456, %v680
          %v682 = vpop.f32.mrb[0].mxu0
          %v683 = vadd.f32 %v460, %v682
          %684 = vmatprep.mubr.f32.mxu0 0.0
          %685 = vmatmul.mubr.f32.gmra.mrb[0].mxu0 %v378
          %v686 = vpop.f32.mrb[0].mxu0
          %v687 = vadd.f32 %v456, %v686
          %v688 = vpop.f32.mrb[0].mxu0
          %v689 = vadd.f32 %v460, %v688
          %690 = vdwg.mxu0
          %691 = vst [vmem:[#allocation3] sm:$0xff] %v532
          %692 = vst [vmem:[#allocation3 + $0x8] sm:$0xff] %v534
          %693 = vst [vmem:[#allocation3 + $0x10] sm:$0xff] %v645
          %694 = vst [vmem:[#allocation3 + $0x18] sm:$0xff] %v647
          %695 = vst [vmem:[#allocation3 + $0x20] sm:$0xff] %v538
          %696 = vst [vmem:[#allocation3 + $0x28] sm:$0xff] %v540
          %697 = vst [vmem:[#allocation3 + $0x30] sm:$0xff] %v651
          %698 = vst [vmem:[#allocation3 + $0x38] sm:$0xff] %v653
          %699 = vst [vmem:[#allocation3 + $0x40] sm:$0xff] %v544
          %700 = vst [vmem:[#allocation3 + $0x48] sm:$0xff] %v546
          %701 = vst [vmem:[#allocation3 + $0x50] sm:$0xff] %v657
          %702 = vst [vmem:[#allocation3 + $0x58] sm:$0xff] %v659
          %703 = vst [vmem:[#allocation3 + $0x60] sm:$0xff] %v550
          %704 = vst [vmem:[#allocation3 + $0x68] sm:$0xff] %v552
          %705 = vst [vmem:[#allocation3 + $0x70] sm:$0xff] %v663
          %706 = vst [vmem:[#allocation3 + $0x78] sm:$0xff] %v665
          %707 = vst [vmem:[#allocation3 + $0x80] sm:$0xff] %v556
          %708 = vst [vmem:[#allocation3 + $0x88] sm:$0xff] %v558
          %709 = vst [vmem:[#allocation3 + $0x90] sm:$0xff] %v669
          %710 = vst [vmem:[#allocation3 + $0x98] sm:$0xff] %v671
          %711 = vst [vmem:[#allocation3 + $0xa0] sm:$0xff] %v562
          %712 = vst [vmem:[#allocation3 + $0xa8] sm:$0xff] %v564
          %713 = vst [vmem:[#allocation3 + $0xb0] sm:$0xff] %v675
          %714 = vst [vmem:[#allocation3 + $0xb8] sm:$0xff] %v677
          %715 = vst [vmem:[#allocation3 + $0xc0] sm:$0xff] %v568
          %716 = vst [vmem:[#allocation3 + $0xc8] sm:$0xff] %v570
          %717 = vst [vmem:[#allocation3 + $0xd0] sm:$0xff] %v681
          %718 = vst [vmem:[#allocation3 + $0xd8] sm:$0xff] %v683
          %719 = vst [vmem:[#allocation3 + $0xe0] sm:$0xff] %v574
          %720 = vst [vmem:[#allocation3 + $0xe8] sm:$0xff] %v576
          %721 = vst [vmem:[#allocation3 + $0xf0] sm:$0xff] %v687
          %722 = vst [vmem:[#allocation3 + $0xf8] sm:$0xff] %v689
        $region56: #{lstm_encoder_forward.1} parent=43 // pred_fallthru
          _
        %p723 = scmp.ne.s32.totalorder %s26, 0
        // Predicated region
        $region57: #{lstm_encoder_forward.1} parent=43 // pred_check
          %p724 = pneg %p723
        $region58: #{lstm_encoder_forward.1} parent=43 // pred_check_branch
          %726 = sbr.rel (%p724) target = $region60
        $region59: #{lstm_encoder_forward.1} parent=43 // pred_region
          %v727 = vld [vmem:[#allocation2] sm:$0xff]
          %v728 = vld [vmem:[#allocation2 + $0x8] sm:$0xff]
          %v729 = vld [vmem:[#allocation2 + $0x10] sm:$0xff]
          %v730 = vld [vmem:[#allocation2 + $0x18] sm:$0xff]
          %v731 = vld [vmem:[#allocation2 + $0x20] sm:$0xff]
          %v732 = vld [vmem:[#allocation2 + $0x28] sm:$0xff]
          %v733 = vld [vmem:[#allocation2 + $0x30] sm:$0xff]
          %v734 = vld [vmem:[#allocation2 + $0x38] sm:$0xff]
          %v735 = vld [vmem:[%s313] sm:$0xff]
          %v736 = vld [vmem:[%s313 + $0x8] sm:$0xff]
          %v737 = vld [vmem:[%s313 + $0x10] sm:$0xff]
          %v738 = vld [vmem:[%s313 + $0x18] sm:$0xff]
          %v739 = vld [vmem:[%s313 + $0x20] sm:$0xff]
          %v740 = vld [vmem:[%s313 + $0x28] sm:$0xff]
          %v741 = vld [vmem:[%s313 + $0x30] sm:$0xff]
          %v742 = vld [vmem:[%s313 + $0x38] sm:$0xff]
          %v743 = vld [vmem:[%s313 + $0x40] sm:$0xff]
          %v744 = vld [vmem:[%s313 + $0x48] sm:$0xff]
          %v745 = vld [vmem:[%s313 + $0x50] sm:$0xff]
          %v746 = vld [vmem:[%s313 + $0x58] sm:$0xff]
          %v747 = vld [vmem:[%s313 + $0x60] sm:$0xff]
          %v748 = vld [vmem:[%s313 + $0x68] sm:$0xff]
          %v749 = vld [vmem:[%s313 + $0x70] sm:$0xff]
          %v750 = vld [vmem:[%s313 + $0x78] sm:$0xff]
          %v751 = vld [vmem:[%s313 + $0x80] sm:$0xff]
          %v752 = vld [vmem:[%s313 + $0x88] sm:$0xff]
          %v753 = vld [vmem:[%s313 + $0x90] sm:$0xff]
          %v754 = vld [vmem:[%s313 + $0x98] sm:$0xff]
          %v755 = vld [vmem:[%s313 + $0xa0] sm:$0xff]
          %v756 = vld [vmem:[%s313 + $0xa8] sm:$0xff]
          %v757 = vld [vmem:[%s313 + $0xb0] sm:$0xff]
          %v758 = vld [vmem:[%s313 + $0xb8] sm:$0xff]
          %v759 = vld [vmem:[%s313 + $0xc0] sm:$0xff]
          %v760 = vld [vmem:[%s313 + $0xc8] sm:$0xff]
          %v761 = vld [vmem:[%s313 + $0xd0] sm:$0xff]
          %v762 = vld [vmem:[%s313 + $0xd8] sm:$0xff]
          %v763 = vld [vmem:[%s313 + $0xe0] sm:$0xff]
          %v764 = vld [vmem:[%s313 + $0xe8] sm:$0xff]
          %v765 = vld [vmem:[%s313 + $0xf0] sm:$0xff]
          %v766 = vld [vmem:[%s313 + $0xf8] sm:$0xff]
          %v767 = vld [vmem:[%s313 + $0x100] sm:$0xff]
          %v768 = vld [vmem:[%s313 + $0x108] sm:$0xff]
          %v769 = vld [vmem:[%s313 + $0x110] sm:$0xff]
          %v770 = vld [vmem:[%s313 + $0x118] sm:$0xff]
          %v771 = vld [vmem:[%s313 + $0x120] sm:$0xff]
          %v772 = vld [vmem:[%s313 + $0x128] sm:$0xff]
          %v773 = vld [vmem:[%s313 + $0x130] sm:$0xff]
          %v774 = vld [vmem:[%s313 + $0x138] sm:$0xff]
          %v775 = vld [vmem:[%s313 + $0x140] sm:$0xff]
          %v776 = vld [vmem:[%s313 + $0x148] sm:$0xff]
          %v777 = vld [vmem:[%s313 + $0x150] sm:$0xff]
          %v778 = vld [vmem:[%s313 + $0x158] sm:$0xff]
          %v779 = vld [vmem:[%s313 + $0x160] sm:$0xff]
          %v780 = vld [vmem:[%s313 + $0x168] sm:$0xff]
          %v781 = vld [vmem:[%s313 + $0x170] sm:$0xff]
          %v782 = vld [vmem:[%s313 + $0x178] sm:$0xff]
          %v783 = vld [vmem:[%s313 + $0x180] sm:$0xff]
          %v784 = vld [vmem:[%s313 + $0x188] sm:$0xff]
          %v785 = vld [vmem:[%s313 + $0x190] sm:$0xff]
          %v786 = vld [vmem:[%s313 + $0x198] sm:$0xff]
          %v787 = vld [vmem:[%s313 + $0x1a0] sm:$0xff]
          %v788 = vld [vmem:[%s313 + $0x1a8] sm:$0xff]
          %v789 = vld [vmem:[%s313 + $0x1b0] sm:$0xff]
          %v790 = vld [vmem:[%s313 + $0x1b8] sm:$0xff]
          %v791 = vld [vmem:[%s313 + $0x1c0] sm:$0xff]
          %v792 = vld [vmem:[%s313 + $0x1c8] sm:$0xff]
          %v793 = vld [vmem:[%s313 + $0x1d0] sm:$0xff]
          %v794 = vld [vmem:[%s313 + $0x1d8] sm:$0xff]
          %v795 = vld [vmem:[%s313 + $0x1e0] sm:$0xff]
          %v796 = vld [vmem:[%s313 + $0x1e8] sm:$0xff]
          %v797 = vld [vmem:[%s313 + $0x1f0] sm:$0xff]
          %v798 = vld [vmem:[%s313 + $0x1f8] sm:$0xff]
          %v799 = vld [vmem:[%s362] sm:$0xf]
          %v801 = vlaneseq
          %v802 = vshrl.u32 %v801, 7
          %v803 = vsub.s32 0, %v802
          %v804 = vrot.slane %v799, %v803
          %v805 = vlaneseq
          %v806 = vshrl.u32 %v805, 7
          %v807 = vsub.s32 1, %v806
          %v808 = vrot.slane %v799, %v807
          %v809 = vlaneseq
          %v810 = vshrl.u32 %v809, 7
          %v811 = vsub.s32 2, %v810
          %v812 = vrot.slane %v799, %v811
          %v813 = vlaneseq
          %v814 = vshrl.u32 %v813, 7
          %v815 = vsub.s32 3, %v814
          %v816 = vrot.slane %v799, %v815
          %821 = vmatprep.subr.mxu0 %v736
          %822 = vmatpush1.msra.mxu0 %v735
          %823 = vmatprep.subr.mxu0 %v740
          %824 = vmatpush1.msra.mxu0 %v739
          %825 = vmatprep.subr.mxu0 %v744
          %826 = vmatpush1.msra.mxu0 %v743
          %827 = vmatprep.subr.mxu0 %v748
          %828 = vmatpush1.msra.mxu0 %v747
          %829 = vmatprep.subr.mxu0 %v752
          %830 = vmatpush1.msra.mxu0 %v751
          %831 = vmatprep.subr.mxu0 %v756
          %832 = vmatpush1.msra.mxu0 %v755
          %833 = vmatprep.subr.mxu0 %v760
          %834 = vmatpush1.msra.mxu0 %v759
          %835 = vmatprep.subr.mxu0 %v764
          %836 = vmatpush1.msra.mxu0 %v763
          %837 = vmatprep.subr.mxu0 %v768
          %838 = vmatpush1.msra.mxu0 %v767
          %839 = vmatprep.subr.mxu0 %v772
          %840 = vmatpush1.msra.mxu0 %v771
          %841 = vmatprep.subr.mxu0 %v776
          %842 = vmatpush1.msra.mxu0 %v775
          %843 = vmatprep.subr.mxu0 %v780
          %844 = vmatpush1.msra.mxu0 %v779
          %845 = vmatprep.subr.mxu0 %v784
          %846 = vmatpush1.msra.mxu0 %v783
          %847 = vmatprep.subr.mxu0 %v788
          %848 = vmatpush1.msra.mxu0 %v787
          %849 = vmatprep.subr.mxu0 %v792
          %850 = vmatpush1.msra.mxu0 %v791
          %851 = vmatprep.subr.mxu0 %v796
          %852 = vmatpush1.msra.mxu0 %v795
          %853 = vmatprep.subr.mxu0 0.0
          %854 = vmatpush1.msra.mxu0 0.0
          %855 = vmatprep.subr.mxu0 0.0
          %856 = vmatpush1.msra.mxu0 0.0
          %857 = vmatprep.subr.mxu0 0.0
          %858 = vmatpush1.msra.mxu0 0.0
          %859 = vmatprep.subr.mxu0 0.0
          %860 = vmatpush1.msra.mxu0 0.0
          %861 = vmatprep.subr.mxu0 0.0
          %862 = vmatpush1.msra.mxu0 0.0
          %863 = vmatprep.subr.mxu0 0.0
          %864 = vmatpush1.msra.mxu0 0.0
          %865 = vmatprep.subr.mxu0 0.0
          %866 = vmatpush1.msra.mxu0 0.0
          %867 = vmatprep.subr.mxu0 0.0
          %868 = vmatpush1.msra.mxu0 0.0
          %869 = vmatprep.subr.mxu0 0.0
          %870 = vmatpush1.msra.mxu0 0.0
          %871 = vmatprep.subr.mxu0 0.0
          %872 = vmatpush1.msra.mxu0 0.0
          %873 = vmatprep.subr.mxu0 0.0
          %874 = vmatpush1.msra.mxu0 0.0
          %875 = vmatprep.subr.mxu0 0.0
          %876 = vmatpush1.msra.mxu0 0.0
          %877 = vmatprep.subr.mxu0 0.0
          %878 = vmatpush1.msra.mxu0 0.0
          %879 = vmatprep.subr.mxu0 0.0
          %880 = vmatpush1.msra.mxu0 0.0
          %881 = vmatprep.subr.mxu0 0.0
          %882 = vmatpush1.msra.mxu0 0.0
          %883 = vmatprep.subr.mxu0 0.0
          %884 = vmatpush1.msra.mxu0 0.0
          %885 = vmatprep.mubr.f32.mxu0 0.0
          %886 = vmatmul.mubr.f32.gmra.mrb[0].mxu0 %v727
          %v887 = vpop.f32.mrb[0].mxu0
          %v888 = vadd.f32 %v804, %v887
          %v889 = vpop.f32.mrb[0].mxu0
          %v890 = vadd.f32 %v808, %v889
          %891 = vmatprep.mubr.f32.mxu0 0.0
          %892 = vmatmul.mubr.f32.gmra.mrb[0].mxu0 %v728
          %v893 = vpop.f32.mrb[0].mxu0
          %v894 = vadd.f32 %v804, %v893
          %v895 = vpop.f32.mrb[0].mxu0
          %v896 = vadd.f32 %v808, %v895
          %897 = vmatprep.mubr.f32.mxu0 0.0
          %898 = vmatmul.mubr.f32.gmra.mrb[0].mxu0 %v729
          %v899 = vpop.f32.mrb[0].mxu0
          %v900 = vadd.f32 %v804, %v899
          %v901 = vpop.f32.mrb[0].mxu0
          %v902 = vadd.f32 %v808, %v901
          %903 = vmatprep.mubr.f32.mxu0 0.0
          %904 = vmatmul.mubr.f32.gmra.mrb[0].mxu0 %v730
          %v905 = vpop.f32.mrb[0].mxu0
          %v906 = vadd.f32 %v804, %v905
          %v907 = vpop.f32.mrb[0].mxu0
          %v908 = vadd.f32 %v808, %v907
          %909 = vmatprep.mubr.f32.mxu0 0.0
          %910 = vmatmul.mubr.f32.gmra.mrb[0].mxu0 %v731
          %v911 = vpop.f32.mrb[0].mxu0
          %v912 = vadd.f32 %v804, %v911
          %v913 = vpop.f32.mrb[0].mxu0
          %v914 = vadd.f32 %v808, %v913
          %915 = vmatprep.mubr.f32.mxu0 0.0
          %916 = vmatmul.mubr.f32.gmra.mrb[0].mxu0 %v732
          %v917 = vpop.f32.mrb[0].mxu0
          %v918 = vadd.f32 %v804, %v917
          %v919 = vpop.f32.mrb[0].mxu0
          %v920 = vadd.f32 %v808, %v919
          %921 = vmatprep.mubr.f32.mxu0 0.0
          %922 = vmatmul.mubr.f32.gmra.mrb[0].mxu0 %v733
          %v923 = vpop.f32.mrb[0].mxu0
          %v924 = vadd.f32 %v804, %v923
          %v925 = vpop.f32.mrb[0].mxu0
          %v926 = vadd.f32 %v808, %v925
          %927 = vmatprep.mubr.f32.mxu0 0.0
          %928 = vmatmul.mubr.f32.gmra.mrb[0].mxu0 %v734
          %v929 = vpop.f32.mrb[0].mxu0
          %v930 = vadd.f32 %v804, %v929
          %v931 = vpop.f32.mrb[0].mxu0
          %v932 = vadd.f32 %v808, %v931
          %933 = vdwg.mxu0
          %934 = vmatprep.subr.mxu0 %v738
          %935 = vmatpush1.msra.mxu0 %v737
          %936 = vmatprep.subr.mxu0 %v742
          %937 = vmatpush1.msra.mxu0 %v741
          %938 = vmatprep.subr.mxu0 %v746
          %939 = vmatpush1.msra.mxu0 %v745
          %940 = vmatprep.subr.mxu0 %v750
          %941 = vmatpush1.msra.mxu0 %v749
          %942 = vmatprep.subr.mxu0 %v754
          %943 = vmatpush1.msra.mxu0 %v753
          %944 = vmatprep.subr.mxu0 %v758
          %945 = vmatpush1.msra.mxu0 %v757
          %946 = vmatprep.subr.mxu0 %v762
          %947 = vmatpush1.msra.mxu0 %v761
          %948 = vmatprep.subr.mxu0 %v766
          %949 = vmatpush1.msra.mxu0 %v765
          %950 = vmatprep.subr.mxu0 %v770
          %951 = vmatpush1.msra.mxu0 %v769
          %952 = vmatprep.subr.mxu0 %v774
          %953 = vmatpush1.msra.mxu0 %v773
          %954 = vmatprep.subr.mxu0 %v778
          %955 = vmatpush1.msra.mxu0 %v777
          %956 = vmatprep.subr.mxu0 %v782
          %957 = vmatpush1.msra.mxu0 %v781
          %958 = vmatprep.subr.mxu0 %v786
          %959 = vmatpush1.msra.mxu0 %v785
          %960 = vmatprep.subr.mxu0 %v790
          %961 = vmatpush1.msra.mxu0 %v789
          %962 = vmatprep.subr.mxu0 %v794
          %963 = vmatpush1.msra.mxu0 %v793
          %964 = vmatprep.subr.mxu0 %v798
          %965 = vmatpush1.msra.mxu0 %v797
          %966 = vmatprep.subr.mxu0 0.0
          %967 = vmatpush1.msra.mxu0 0.0
          %968 = vmatprep.subr.mxu0 0.0
          %969 = vmatpush1.msra.mxu0 0.0
          %970 = vmatprep.subr.mxu0 0.0
          %971 = vmatpush1.msra.mxu0 0.0
          %972 = vmatprep.subr.mxu0 0.0
          %973 = vmatpush1.msra.mxu0 0.0
          %974 = vmatprep.subr.mxu0 0.0
          %975 = vmatpush1.msra.mxu0 0.0
          %976 = vmatprep.subr.mxu0 0.0
          %977 = vmatpush1.msra.mxu0 0.0
          %978 = vmatprep.subr.mxu0 0.0
          %979 = vmatpush1.msra.mxu0 0.0
          %980 = vmatprep.subr.mxu0 0.0
          %981 = vmatpush1.msra.mxu0 0.0
          %982 = vmatprep.subr.mxu0 0.0
          %983 = vmatpush1.msra.mxu0 0.0
          %984 = vmatprep.subr.mxu0 0.0
          %985 = vmatpush1.msra.mxu0 0.0
          %986 = vmatprep.subr.mxu0 0.0
          %987 = vmatpush1.msra.mxu0 0.0
          %988 = vmatprep.subr.mxu0 0.0
          %989 = vmatpush1.msra.mxu0 0.0
          %990 = vmatprep.subr.mxu0 0.0
          %991 = vmatpush1.msra.mxu0 0.0
          %992 = vmatprep.subr.mxu0 0.0
          %993 = vmatpush1.msra.mxu0 0.0
          %994 = vmatprep.subr.mxu0 0.0
          %995 = vmatpush1.msra.mxu0 0.0
          %996 = vmatprep.subr.mxu0 0.0
          %997 = vmatpush1.msra.mxu0 0.0
          %998 = vmatprep.mubr.f32.mxu0 0.0
          %999 = vmatmul.mubr.f32.gmra.mrb[0].mxu0 %v727
          %v1000 = vpop.f32.mrb[0].mxu0
          %v1001 = vadd.f32 %v812, %v1000
          %v1002 = vpop.f32.mrb[0].mxu0
          %v1003 = vadd.f32 %v816, %v1002
          %1004 = vmatprep.mubr.f32.mxu0 0.0
          %1005 = vmatmul.mubr.f32.gmra.mrb[0].mxu0 %v728
          %v1006 = vpop.f32.mrb[0].mxu0
          %v1007 = vadd.f32 %v812, %v1006
          %v1008 = vpop.f32.mrb[0].mxu0
          %v1009 = vadd.f32 %v816, %v1008
          %1010 = vmatprep.mubr.f32.mxu0 0.0
          %1011 = vmatmul.mubr.f32.gmra.mrb[0].mxu0 %v729
          %v1012 = vpop.f32.mrb[0].mxu0
          %v1013 = vadd.f32 %v812, %v1012
          %v1014 = vpop.f32.mrb[0].mxu0
          %v1015 = vadd.f32 %v816, %v1014
          %1016 = vmatprep.mubr.f32.mxu0 0.0
          %1017 = vmatmul.mubr.f32.gmra.mrb[0].mxu0 %v730
          %v1018 = vpop.f32.mrb[0].mxu0
          %v1019 = vadd.f32 %v812, %v1018
          %v1020 = vpop.f32.mrb[0].mxu0
          %v1021 = vadd.f32 %v816, %v1020
          %1022 = vmatprep.mubr.f32.mxu0 0.0
          %1023 = vmatmul.mubr.f32.gmra.mrb[0].mxu0 %v731
          %v1024 = vpop.f32.mrb[0].mxu0
          %v1025 = vadd.f32 %v812, %v1024
          %v1026 = vpop.f32.mrb[0].mxu0
          %v1027 = vadd.f32 %v816, %v1026
          %1028 = vmatprep.mubr.f32.mxu0 0.0
          %1029 = vmatmul.mubr.f32.gmra.mrb[0].mxu0 %v732
          %v1030 = vpop.f32.mrb[0].mxu0
          %v1031 = vadd.f32 %v812, %v1030
          %v1032 = vpop.f32.mrb[0].mxu0
          %v1033 = vadd.f32 %v816, %v1032
          %1034 = vmatprep.mubr.f32.mxu0 0.0
          %1035 = vmatmul.mubr.f32.gmra.mrb[0].mxu0 %v733
          %v1036 = vpop.f32.mrb[0].mxu0
          %v1037 = vadd.f32 %v812, %v1036
          %v1038 = vpop.f32.mrb[0].mxu0
          %v1039 = vadd.f32 %v816, %v1038
          %1040 = vmatprep.mubr.f32.mxu0 0.0
          %1041 = vmatmul.mubr.f32.gmra.mrb[0].mxu0 %v734
          %v1042 = vpop.f32.mrb[0].mxu0
          %v1043 = vadd.f32 %v812, %v1042
          %v1044 = vpop.f32.mrb[0].mxu0
          %v1045 = vadd.f32 %v816, %v1044
          %1046 = vdwg.mxu0
          %1047 = vst [vmem:[#allocation3] sm:$0xff] %v888
          %1048 = vst [vmem:[#allocation3 + $0x8] sm:$0xff] %v890
          %1049 = vst [vmem:[#allocation3 + $0x10] sm:$0xff] %v1001
          %1050 = vst [vmem:[#allocation3 + $0x18] sm:$0xff] %v1003
          %1051 = vst [vmem:[#allocation3 + $0x20] sm:$0xff] %v894
          %1052 = vst [vmem:[#allocation3 + $0x28] sm:$0xff] %v896
          %1053 = vst [vmem:[#allocation3 + $0x30] sm:$0xff] %v1007
          %1054 = vst [vmem:[#allocation3 + $0x38] sm:$0xff] %v1009
          %1055 = vst [vmem:[#allocation3 + $0x40] sm:$0xff] %v900
          %1056 = vst [vmem:[#allocation3 + $0x48] sm:$0xff] %v902
          %1057 = vst [vmem:[#allocation3 + $0x50] sm:$0xff] %v1013
          %1058 = vst [vmem:[#allocation3 + $0x58] sm:$0xff] %v1015
          %1059 = vst [vmem:[#allocation3 + $0x60] sm:$0xff] %v906
          %1060 = vst [vmem:[#allocation3 + $0x68] sm:$0xff] %v908
          %1061 = vst [vmem:[#allocation3 + $0x70] sm:$0xff] %v1019
          %1062 = vst [vmem:[#allocation3 + $0x78] sm:$0xff] %v1021
          %1063 = vst [vmem:[#allocation3 + $0x80] sm:$0xff] %v912
          %1064 = vst [vmem:[#allocation3 + $0x88] sm:$0xff] %v914
          %1065 = vst [vmem:[#allocation3 + $0x90] sm:$0xff] %v1025
          %1066 = vst [vmem:[#allocation3 + $0x98] sm:$0xff] %v1027
          %1067 = vst [vmem:[#allocation3 + $0xa0] sm:$0xff] %v918
          %1068 = vst [vmem:[#allocation3 + $0xa8] sm:$0xff] %v920
          %1069 = vst [vmem:[#allocation3 + $0xb0] sm:$0xff] %v1031
          %1070 = vst [vmem:[#allocation3 + $0xb8] sm:$0xff] %v1033
          %1071 = vst [vmem:[#allocation3 + $0xc0] sm:$0xff] %v924
          %1072 = vst [vmem:[#allocation3 + $0xc8] sm:$0xff] %v926
          %1073 = vst [vmem:[#allocation3 + $0xd0] sm:$0xff] %v1037
          %1074 = vst [vmem:[#allocation3 + $0xd8] sm:$0xff] %v1039
          %1075 = vst [vmem:[#allocation3 + $0xe0] sm:$0xff] %v930
          %1076 = vst [vmem:[#allocation3 + $0xe8] sm:$0xff] %v932
          %1077 = vst [vmem:[#allocation3 + $0xf0] sm:$0xff] %v1043
          %1078 = vst [vmem:[#allocation3 + $0xf8] sm:$0xff] %v1045
        $region60: #{lstm_encoder_forward.1} parent=43 // pred_fallthru
          _
        %v1079 = vld [vmem:[#allocation4] sm:$0xff]
        %v1080 = vld [vmem:[#allocation5] sm:$0xff]
        loop: start=0, step=1, limit=8
        $region61: #{lstm_encoder_forward.1} parent=43 // loop_pre_header
          _
        $region62: #{lstm_encoder_forward.1} parent=43 // loop_header
          %s1082 = sphi 0, %s1086
          %p1083 = scmp.ge.s32.totalorder %s1082, 8
          %v1087 = vphi %v1079, %v1332
          %v1088 = vphi %v1080, %v1330
        $region63: #{lstm_encoder_forward.1} parent=43 // loop_header_branch
          %1085 = sbr.rel (%p1083) target = $region67
        $region64: #{lstm_encoder_forward.1} parent=43 // loop_body
          %s1089 = smul.u32 %s1082, 8
          %s1090 = sshra.s32 %s1089, 3
          %s1091 = sand.u32 %s1089, 7
          %s1092 = smul.u32 %s1090, 4
          %s1093 = smul.addr %s1092, 8
          %s1094 = scalar_lea.vmem [#allocation3], %s1093
          %v1095 = vld [vmem:[%s1094] sm:$0xff]
          %v1096 = vld [vmem:[%s1094 + $0x8] sm:$0xff]
          %v1097 = vld [vmem:[%s1094 + $0x10] sm:$0xff]
          %v1098 = vld [vmem:[%s1094 + $0x18] sm:$0xff]
          %v1099 = vld [vmem:[%s322] sm:$0xff]
          %v1100 = vld [vmem:[%s322 + $0x8] sm:$0xff]
          %v1101 = vld [vmem:[%s322 + $0x10] sm:$0xff]
          %v1102 = vld [vmem:[%s322 + $0x18] sm:$0xff]
          %v1103 = vld [vmem:[%s322 + $0x20] sm:$0xff]
          %v1104 = vld [vmem:[%s322 + $0x28] sm:$0xff]
          %v1105 = vld [vmem:[%s322 + $0x30] sm:$0xff]
          %v1106 = vld [vmem:[%s322 + $0x38] sm:$0xff]
          %v1107 = vld [vmem:[%s322 + $0x40] sm:$0xff]
          %v1108 = vld [vmem:[%s322 + $0x48] sm:$0xff]
          %v1109 = vld [vmem:[%s322 + $0x50] sm:$0xff]
          %v1110 = vld [vmem:[%s322 + $0x58] sm:$0xff]
          %v1111 = vld [vmem:[%s322 + $0x60] sm:$0xff]
          %v1112 = vld [vmem:[%s322 + $0x68] sm:$0xff]
          %v1113 = vld [vmem:[%s322 + $0x70] sm:$0xff]
          %v1114 = vld [vmem:[%s322 + $0x78] sm:$0xff]
          %v1115 = vld [vmem:[%s322 + $0x80] sm:$0xff]
          %v1116 = vld [vmem:[%s322 + $0x88] sm:$0xff]
          %v1117 = vld [vmem:[%s322 + $0x90] sm:$0xff]
          %v1118 = vld [vmem:[%s322 + $0x98] sm:$0xff]
          %v1119 = vld [vmem:[%s322 + $0xa0] sm:$0xff]
          %v1120 = vld [vmem:[%s322 + $0xa8] sm:$0xff]
          %v1121 = vld [vmem:[%s322 + $0xb0] sm:$0xff]
          %v1122 = vld [vmem:[%s322 + $0xb8] sm:$0xff]
          %v1123 = vld [vmem:[%s322 + $0xc0] sm:$0xff]
          %v1124 = vld [vmem:[%s322 + $0xc8] sm:$0xff]
          %v1125 = vld [vmem:[%s322 + $0xd0] sm:$0xff]
          %v1126 = vld [vmem:[%s322 + $0xd8] sm:$0xff]
          %v1127 = vld [vmem:[%s322 + $0xe0] sm:$0xff]
          %v1128 = vld [vmem:[%s322 + $0xe8] sm:$0xff]
          %v1129 = vld [vmem:[%s322 + $0xf0] sm:$0xff]
          %v1130 = vld [vmem:[%s322 + $0xf8] sm:$0xff]
          %v1131 = vld [vmem:[%s322 + $0x100] sm:$0xff]
          %v1132 = vld [vmem:[%s322 + $0x108] sm:$0xff]
          %v1133 = vld [vmem:[%s322 + $0x110] sm:$0xff]
          %v1134 = vld [vmem:[%s322 + $0x118] sm:$0xff]
          %v1135 = vld [vmem:[%s322 + $0x120] sm:$0xff]
          %v1136 = vld [vmem:[%s322 + $0x128] sm:$0xff]
          %v1137 = vld [vmem:[%s322 + $0x130] sm:$0xff]
          %v1138 = vld [vmem:[%s322 + $0x138] sm:$0xff]
          %v1139 = vld [vmem:[%s322 + $0x140] sm:$0xff]
          %v1140 = vld [vmem:[%s322 + $0x148] sm:$0xff]
          %v1141 = vld [vmem:[%s322 + $0x150] sm:$0xff]
          %v1142 = vld [vmem:[%s322 + $0x158] sm:$0xff]
          %v1143 = vld [vmem:[%s322 + $0x160] sm:$0xff]
          %v1144 = vld [vmem:[%s322 + $0x168] sm:$0xff]
          %v1145 = vld [vmem:[%s322 + $0x170] sm:$0xff]
          %v1146 = vld [vmem:[%s322 + $0x178] sm:$0xff]
          %v1147 = vld [vmem:[%s322 + $0x180] sm:$0xff]
          %v1148 = vld [vmem:[%s322 + $0x188] sm:$0xff]
          %v1149 = vld [vmem:[%s322 + $0x190] sm:$0xff]
          %v1150 = vld [vmem:[%s322 + $0x198] sm:$0xff]
          %v1151 = vld [vmem:[%s322 + $0x1a0] sm:$0xff]
          %v1152 = vld [vmem:[%s322 + $0x1a8] sm:$0xff]
          %v1153 = vld [vmem:[%s322 + $0x1b0] sm:$0xff]
          %v1154 = vld [vmem:[%s322 + $0x1b8] sm:$0xff]
          %v1155 = vld [vmem:[%s322 + $0x1c0] sm:$0xff]
          %v1156 = vld [vmem:[%s322 + $0x1c8] sm:$0xff]
          %v1157 = vld [vmem:[%s322 + $0x1d0] sm:$0xff]
          %v1158 = vld [vmem:[%s322 + $0x1d8] sm:$0xff]
          %v1159 = vld [vmem:[%s322 + $0x1e0] sm:$0xff]
          %v1160 = vld [vmem:[%s322 + $0x1e8] sm:$0xff]
          %v1161 = vld [vmem:[%s322 + $0x1f0] sm:$0xff]
          %v1162 = vld [vmem:[%s322 + $0x1f8] sm:$0xff]
          %1163 = vmatprep.subr.mxu0 %v1100
          %1164 = vmatpush1.msra.mxu0 %v1099
          %1165 = vmatprep.subr.mxu0 %v1104
          %1166 = vmatpush1.msra.mxu0 %v1103
          %1167 = vmatprep.subr.mxu0 %v1108
          %1168 = vmatpush1.msra.mxu0 %v1107
          %1169 = vmatprep.subr.mxu0 %v1112
          %1170 = vmatpush1.msra.mxu0 %v1111
          %1171 = vmatprep.subr.mxu0 %v1116
          %1172 = vmatpush1.msra.mxu0 %v1115
          %1173 = vmatprep.subr.mxu0 %v1120
          %1174 = vmatpush1.msra.mxu0 %v1119
          %1175 = vmatprep.subr.mxu0 %v1124
          %1176 = vmatpush1.msra.mxu0 %v1123
          %1177 = vmatprep.subr.mxu0 %v1128
          %1178 = vmatpush1.msra.mxu0 %v1127
          %1179 = vmatprep.subr.mxu0 %v1132
          %1180 = vmatpush1.msra.mxu0 %v1131
          %1181 = vmatprep.subr.mxu0 %v1136
          %1182 = vmatpush1.msra.mxu0 %v1135
          %1183 = vmatprep.subr.mxu0 %v1140
          %1184 = vmatpush1.msra.mxu0 %v1139
          %1185 = vmatprep.subr.mxu0 %v1144
          %1186 = vmatpush1.msra.mxu0 %v1143
          %1187 = vmatprep.subr.mxu0 %v1148
          %1188 = vmatpush1.msra.mxu0 %v1147
          %1189 = vmatprep.subr.mxu0 %v1152
          %1190 = vmatpush1.msra.mxu0 %v1151
          %1191 = vmatprep.subr.mxu0 %v1156
          %1192 = vmatpush1.msra.mxu0 %v1155
          %1193 = vmatprep.subr.mxu0 %v1160
          %1194 = vmatpush1.msra.mxu0 %v1159
          %1195 = vmatprep.subr.mxu0 0.0
          %1196 = vmatpush1.msra.mxu0 0.0
          %1197 = vmatprep.subr.mxu0 0.0
          %1198 = vmatpush1.msra.mxu0 0.0
          %1199 = vmatprep.subr.mxu0 0.0
          %1200 = vmatpush1.msra.mxu0 0.0
          %1201 = vmatprep.subr.mxu0 0.0
          %1202 = vmatpush1.msra.mxu0 0.0
          %1203 = vmatprep.subr.mxu0 0.0
          %1204 = vmatpush1.msra.mxu0 0.0
          %1205 = vmatprep.subr.mxu0 0.0
          %1206 = vmatpush1.msra.mxu0 0.0
          %1207 = vmatprep.subr.mxu0 0.0
          %1208 = vmatpush1.msra.mxu0 0.0
          %1209 = vmatprep.subr.mxu0 0.0
          %1210 = vmatpush1.msra.mxu0 0.0
          %1211 = vmatprep.subr.mxu0 0.0
          %1212 = vmatpush1.msra.mxu0 0.0
          %1213 = vmatprep.subr.mxu0 0.0
          %1214 = vmatpush1.msra.mxu0 0.0
          %1215 = vmatprep.subr.mxu0 0.0
          %1216 = vmatpush1.msra.mxu0 0.0
          %1217 = vmatprep.subr.mxu0 0.0
          %1218 = vmatpush1.msra.mxu0 0.0
          %1219 = vmatprep.subr.mxu0 0.0
          %1220 = vmatpush1.msra.mxu0 0.0
          %1221 = vmatprep.subr.mxu0 0.0
          %1222 = vmatpush1.msra.mxu0 0.0
          %1223 = vmatprep.subr.mxu0 0.0
          %1224 = vmatpush1.msra.mxu0 0.0
          %1225 = vmatprep.subr.mxu0 0.0
          %1226 = vmatpush1.msra.mxu0 0.0
          %1227 = vmatprep.mubr.f32.mxu0 0.0
          %1228 = vmatmul.mubr.f32.gmra.mrb[0].mxu0 %v1087
          %v1229 = vpop.f32.mrb[0].mxu0
          %v1230 = vadd.f32 0.0, %v1229
          %v1231 = vpop.f32.mrb[0].mxu0
          %v1232 = vadd.f32 0.0, %v1231
          %1233 = vdwg.mxu0
          %1234 = vmatprep.subr.mxu0 %v1102
          %1235 = vmatpush1.msra.mxu0 %v1101
          %1236 = vmatprep.subr.mxu0 %v1106
          %1237 = vmatpush1.msra.mxu0 %v1105
          %1238 = vmatprep.subr.mxu0 %v1110
          %1239 = vmatpush1.msra.mxu0 %v1109
          %1240 = vmatprep.subr.mxu0 %v1114
          %1241 = vmatpush1.msra.mxu0 %v1113
          %1242 = vmatprep.subr.mxu0 %v1118
          %1243 = vmatpush1.msra.mxu0 %v1117
          %1244 = vmatprep.subr.mxu0 %v1122
          %1245 = vmatpush1.msra.mxu0 %v1121
          %1246 = vmatprep.subr.mxu0 %v1126
          %1247 = vmatpush1.msra.mxu0 %v1125
          %1248 = vmatprep.subr.mxu0 %v1130
          %1249 = vmatpush1.msra.mxu0 %v1129
          %1250 = vmatprep.subr.mxu0 %v1134
          %1251 = vmatpush1.msra.mxu0 %v1133
          %1252 = vmatprep.subr.mxu0 %v1138
          %1253 = vmatpush1.msra.mxu0 %v1137
          %1254 = vmatprep.subr.mxu0 %v1142
          %1255 = vmatpush1.msra.mxu0 %v1141
          %1256 = vmatprep.subr.mxu0 %v1146
          %1257 = vmatpush1.msra.mxu0 %v1145
          %1258 = vmatprep.subr.mxu0 %v1150
          %1259 = vmatpush1.msra.mxu0 %v1149
          %1260 = vmatprep.subr.mxu0 %v1154
          %1261 = vmatpush1.msra.mxu0 %v1153
          %1262 = vmatprep.subr.mxu0 %v1158
          %1263 = vmatpush1.msra.mxu0 %v1157
          %1264 = vmatprep.subr.mxu0 %v1162
          %1265 = vmatpush1.msra.mxu0 %v1161
          %1266 = vmatprep.subr.mxu0 0.0
          %1267 = vmatpush1.msra.mxu0 0.0
          %1268 = vmatprep.subr.mxu0 0.0
          %1269 = vmatpush1.msra.mxu0 0.0
          %1270 = vmatprep.subr.mxu0 0.0
          %1271 = vmatpush1.msra.mxu0 0.0
          %1272 = vmatprep.subr.mxu0 0.0
          %1273 = vmatpush1.msra.mxu0 0.0
          %1274 = vmatprep.subr.mxu0 0.0
          %1275 = vmatpush1.msra.mxu0 0.0
          %1276 = vmatprep.subr.mxu0 0.0
          %1277 = vmatpush1.msra.mxu0 0.0
          %1278 = vmatprep.subr.mxu0 0.0
          %1279 = vmatpush1.msra.mxu0 0.0
          %1280 = vmatprep.subr.mxu0 0.0
          %1281 = vmatpush1.msra.mxu0 0.0
          %1282 = vmatprep.subr.mxu0 0.0
          %1283 = vmatpush1.msra.mxu0 0.0
          %1284 = vmatprep.subr.mxu0 0.0
          %1285 = vmatpush1.msra.mxu0 0.0
          %1286 = vmatprep.subr.mxu0 0.0
          %1287 = vmatpush1.msra.mxu0 0.0
          %1288 = vmatprep.subr.mxu0 0.0
          %1289 = vmatpush1.msra.mxu0 0.0
          %1290 = vmatprep.subr.mxu0 0.0
          %1291 = vmatpush1.msra.mxu0 0.0
          %1292 = vmatprep.subr.mxu0 0.0
          %1293 = vmatpush1.msra.mxu0 0.0
          %1294 = vmatprep.subr.mxu0 0.0
          %1295 = vmatpush1.msra.mxu0 0.0
          %1296 = vmatprep.subr.mxu0 0.0
          %1297 = vmatpush1.msra.mxu0 0.0
          %1298 = vmatprep.mubr.f32.mxu0 0.0
          %1299 = vmatmul.mubr.f32.gmra.mrb[0].mxu0 %v1087
          %v1300 = vpop.f32.mrb[0].mxu0
          %v1301 = vadd.f32 0.0, %v1300
          %v1302 = vpop.f32.mrb[0].mxu0
          %v1303 = vadd.f32 0.0, %v1302
          %1304 = vdwg.mxu0
          %v1305 = vadd.f32 %v1095, %v1230
          %v1306 = vadd.f32 %v1096, %v1232
          %v1307 = vadd.f32 %v1097, %v1301
          %v1308 = vadd.f32 %v1098, %v1303
          %v1309 = vxor.u32 %v1305, 2147483648
          %v1310 = vmul.f32 %v1309, 1.442695
          %v1311 = vpow.pop %v1310
          %v1312 = vadd.f32 %v1311, 1.0
          %v1313 = vrcp.pop %v1312
          %v1314 = vmul.f32 1.0, %v1313
          %v1315 = vxor.u32 %v1306, 2147483648
          %v1316 = vmul.f32 %v1315, 1.442695
          %v1317 = vpow.pop %v1316
          %v1318 = vadd.f32 %v1317, 1.0
          %v1319 = vrcp.pop %v1318
          %v1320 = vmul.f32 1.0, %v1319
          %v1321 = vtanh.pop %v1307
          %v1322 = vxor.u32 %v1308, 2147483648
          %v1323 = vmul.f32 %v1322, 1.442695
          %v1324 = vpow.pop %v1323
          %v1325 = vadd.f32 %v1324, 1.0
          %v1326 = vrcp.pop %v1325
          %v1327 = vmul.f32 1.0, %v1326
          %v1328 = vmul.f32 %v1320, %v1088
          %v1329 = vmul.f32 %v1314, %v1321
          %v1330 = vadd.f32 %v1328, %v1329
          %v1331 = vtanh.pop %v1330
          %v1332 = vmul.f32 %v1327, %v1331
          %s1333 = scalar_lea.vmem [#allocation2], %s1089
          %1334 = vst [vmem:[%s1333] sm:$0xff] %v1332
        $region65: #{lstm_encoder_forward.1} parent=43 // loop_footer
          %s1086 = sadd.s32 1, %s1082
        $region66: #{lstm_encoder_forward.1} parent=43 // loop_footer_branch
          %1081 = sbr.rel target = $region62
        $region67: #{lstm_encoder_forward.1} parent=43 // loop_exit
          _
        %1335 = vst [vmem:[#allocation4] sm:$0xff] %v1087
        %1336 = vst [vmem:[#allocation5] sm:$0xff] %v1088
        %p1337 = scmp.eq.s32.totalorder %s26, 1
        // Predicated region
        $region68: #{lstm_encoder_forward.1} parent=43 // pred_check
          %p1338 = pneg %p1337
        $region69: #{lstm_encoder_forward.1} parent=43 // pred_check_branch
          %1340 = sbr.rel (%p1338) target = $region71
        $region70: #{lstm_encoder_forward.1} parent=43 // pred_region
          %v1341 = vld [vmem:[#allocation2] sm:$0xff]
          %v1342 = vld [vmem:[#allocation2 + $0x8] sm:$0xff]
          %v1343 = vld [vmem:[#allocation2 + $0x10] sm:$0xff]
          %v1344 = vld [vmem:[#allocation2 + $0x18] sm:$0xff]
          %v1345 = vld [vmem:[#allocation2 + $0x20] sm:$0xff]
          %v1346 = vld [vmem:[#allocation2 + $0x28] sm:$0xff]
          %v1347 = vld [vmem:[#allocation2 + $0x30] sm:$0xff]
          %v1348 = vld [vmem:[#allocation2 + $0x38] sm:$0xff]
          %1349 = vst [vmem:[%s6] sm:$0xff] %v1341
          %1350 = vst [vmem:[%s6 + $0x8] sm:$0xff] %v1342
          %1351 = vst [vmem:[%s6 + $0x10] sm:$0xff] %v1343
          %1352 = vst [vmem:[%s6 + $0x18] sm:$0xff] %v1344
          %1353 = vst [vmem:[%s6 + $0x20] sm:$0xff] %v1345
          %1354 = vst [vmem:[%s6 + $0x28] sm:$0xff] %v1346
          %1355 = vst [vmem:[%s6 + $0x30] sm:$0xff] %v1347
          %1356 = vst [vmem:[%s6 + $0x38] sm:$0xff] %v1348
          %1357 = vst [vmem:[%s7] sm:$0xff] %v1087
          %1358 = vst [vmem:[%s8] sm:$0xff] %v1088
        $region71: #{lstm_encoder_forward.1} parent=43 // pred_fallthru
          _
        // Predicated region
        $region72: #{lstm_encoder_forward.1} parent=43 // pred_check
          %p1359 = pneg %p180
        $region73: #{lstm_encoder_forward.1} parent=43 // pred_check_branch
          %1361 = sbr.rel (%p1359) target = $region75
        $region74: #{lstm_encoder_forward.1} parent=43 // pred_region
          _
        $region75: #{lstm_encoder_forward.1} parent=43 // pred_fallthru
          _
        // Predicated region
        $region76: #{lstm_encoder_forward.1} parent=43 // pred_check
          %p1362 = pneg %p201
        $region77: #{lstm_encoder_forward.1} parent=43 // pred_check_branch
          %1364 = sbr.rel (%p1362) target = $region79
        $region78: #{lstm_encoder_forward.1} parent=43 // pred_region
          _
        $region79: #{lstm_encoder_forward.1} parent=43 // pred_fallthru
          _
        // Predicated region
        $region80: #{lstm_encoder_forward.1} parent=43 // pred_check
          %p1365 = pneg %p222
        $region81: #{lstm_encoder_forward.1} parent=43 // pred_check_branch
          %1367 = sbr.rel (%p1365) target = $region83
        $region82: #{lstm_encoder_forward.1} parent=43 // pred_region
          _
        $region83: #{lstm_encoder_forward.1} parent=43 // pred_fallthru
          _
        // Predicated region
        $region84: #{lstm_encoder_forward.1} parent=43 // pred_check
          %p1368 = pneg %p180
        $region85: #{lstm_encoder_forward.1} parent=43 // pred_check_branch
          %1370 = sbr.rel (%p1368) target = $region87
        $region86: #{lstm_encoder_forward.1} parent=43 // pred_region
          _
        $region87: #{lstm_encoder_forward.1} parent=43 // pred_fallthru
          _
        // Predicated region
        $region88: #{lstm_encoder_forward.1} parent=43 // pred_check
          %p1371 = pneg %p201
        $region89: #{lstm_encoder_forward.1} parent=43 // pred_check_branch
          %1373 = sbr.rel (%p1371) target = $region91
        $region90: #{lstm_encoder_forward.1} parent=43 // pred_region
          _
        $region91: #{lstm_encoder_forward.1} parent=43 // pred_fallthru
          _
        // Predicated region
        $region92: #{lstm_encoder_forward.1} parent=43 // pred_check
          %p1374 = pneg %p222
        $region93: #{lstm_encoder_forward.1} parent=43 // pred_check_branch
          %1376 = sbr.rel (%p1374) target = $region95
        $region94: #{lstm_encoder_forward.1} parent=43 // pred_region
          _
        $region95: #{lstm_encoder_forward.1} parent=43 // pred_fallthru
          _
      $region44: #{lstm_encoder_forward.1} parent=5 // pred_fallthru
        _
      %p1377 = scmp.le.s32.totalorder 2, %s21
      // Predicated region
      $region96: #{lstm_encoder_forward.1} parent=5 // pred_check
        %p1378 = pneg %p1377
      $region97: #{lstm_encoder_forward.1} parent=5 // pred_check_branch
        %1380 = sbr.rel (%p1378) target = $region99
      $region98: #{lstm_encoder_forward.1} parent=5 // pred_region
        %s1381 = ssub.s32 %s21, 2
      $region99: #{lstm_encoder_forward.1} parent=5 // pred_fallthru
        _
    $region6: #{lstm_encoder_forward.1} parent=1 // loop_footer
      %s25 = sadd.s32 1, %s21
    $region7: #{lstm_encoder_forward.1} parent=1 // loop_footer_branch
      %20 = sbr.rel target = $region3
    $region8: #{lstm_encoder_forward.1} parent=1 // loop_exit
      _
    %1382 = vsyncpa [#allocation7], 1
    %s1383 = scalar_lea.sflag [#allocation7], 1
    %1384 = vsyncpa %s1383, 1
    %1385 = vsyncpa [#allocation9], 1
    %s1386 = scalar_lea.sflag [#allocation9], 1
    %1387 = vsyncpa %s1386, 1

</llo_original>
